<compile_context>
chip_gen: v5e
topology: v5e:2x2
jax: 0.10.0
libtpu: 0.0.40
codegen_flags: <defaults>
</compile_context>

<pallas_src>
import math

import jax
import jax.numpy as jnp
from jax import lax
from jax.experimental import pallas as pl
from jax.experimental.pallas import tpu as pltpu

LOG_STD_MIN = -20.0
LOG_STD_MAX = 2.0


def _sigmoid(x):
    # explicit form (exp lives on the EUP; guaranteed to lower)
    return 1.0 / (1.0 + jnp.exp(-x))


def encoder_kernel(x_ref, eps_ref,
                   we_ref, wlstm_ref, wout_ref, whead_ref, bias_ref,
                   out_ref, gx_ref):
    """One batch tile of the Encoder forward pass.

    x_ref     : (T, Bt, D)  time-major observations (f32)
    eps_ref   : (Bt, L)     N(0,1) noise for rsample (f32)
    we_ref    : (D, H)      embed weight (bf16)
    wlstm_ref : (2H, 4H)    [W_ih ; W_hh], PyTorch gate order i|f|g|o (bf16)
    wout_ref  : (H, E)      out weight (bf16)
    whead_ref : (E, 2L)     [W_mu | W_log_std] (bf16)
    bias_ref  : (4, 4H)     row0=b_embed, row1=b_ih+b_hh, row2=b_out,
                            row3=[b_mu|b_log_std]  (f32)
    out_ref   : (Bt, 3L)    packed [sample | mu | std]
    gx_ref    : (T, Bt, 4H) scratch: input-to-gate pre-activations
    """
    T, Bt, D = x_ref.shape
    H = we_ref.shape[1]
    E = wout_ref.shape[1]
    L = whead_ref.shape[1] // 2

    b_embed = bias_ref[0:1, :H]
    b_lstm = bias_ref[1:2, :]            # b_ih + b_hh, (1, 4H)
    b_out = bias_ref[2:3, :E]
    b_head = bias_ref[3:4, :2 * L]

    # --- embed(x) for the whole sequence in one MXU pass ------------------
    x2d = x_ref[...].reshape(T * Bt, D).astype(jnp.bfloat16)
    embed = jnp.dot(x2d, we_ref[...],
                    preferred_element_type=jnp.float32) + b_embed     # (T*Bt, H) f32

    # --- input-to-gate part of the LSTM for all timesteps at once ---------
    gates_x = jnp.dot(embed.astype(jnp.bfloat16), wlstm_ref[0:H, :],
                      preferred_element_type=jnp.float32) + b_lstm    # (T*Bt, 4H)
    gx_ref[...] = gates_x.reshape(T, Bt, 4 * H)

    # --- LSTM recurrence: only h @ W_hh per step ---------------------------
    def step(t, carry):
        h, c = carry
        g = gx_ref[t] + jnp.dot(h.astype(jnp.bfloat16), wlstm_ref[H:2 * H, :],
                                preferred_element_type=jnp.float32)
        i = _sigmoid(g[:, 0:H])
        f = _sigmoid(g[:, H:2 * H])
        gg = jnp.tanh(g[:, 2 * H:3 * H])
        o = _sigmoid(g[:, 3 * H:4 * H])
        c_new = f * c + i * gg
        h_new = o * jnp.tanh(c_new)
        return h_new, c_new

    h0 = jnp.zeros((Bt, H), jnp.float32)
    h_last, _ = lax.fori_loop(0, T, step, (h0, h0), unroll=True)

    # --- o = relu(out(h_T)) -------------------------------------------------
    enc = jnp.maximum(
        jnp.dot(h_last.astype(jnp.bfloat16), wout_ref[...],
                preferred_element_type=jnp.float32) + b_out, 0.0)     # (Bt, E)

    # --- fused heads: [mu | log_std] ----------------------------------------
    heads = jnp.dot(enc.astype(jnp.bfloat16), whead_ref[...],
                    preferred_element_type=jnp.float32) + b_head      # (Bt, 2L)
    mu = heads[:, 0:L]
    log_std = heads[:, L:2 * L]
    std = jnp.exp(jnp.clip(log_std, LOG_STD_MIN, LOG_STD_MAX))

    # Normal(mu, std).rsample() == mu + std * eps
    sample = mu + std * eps_ref[...]

    out_ref[...] = jnp.concatenate([sample, mu, std], axis=-1)


def make_params(key, input_dim, lstm_hidden=128, enc_size=64, latent_dim=12):
    """Deterministic synthetic parameters, same shapes/init style as PyTorch."""
    H, E, L = lstm_hidden, enc_size, latent_dim

    def unif(k, shape, fan_in):
        b = 1.0 / math.sqrt(fan_in)
        return jax.random.uniform(k, shape, jnp.float32, -b, b)

    ks = jax.random.split(key, 12)
    return {
        "w_embed": unif(ks[0], (input_dim, H), input_dim),
        "b_embed": unif(ks[1], (H,), input_dim),
        "w_ih": unif(ks[2], (H, 4 * H), H),      # gate order i|f|g|o
        "w_hh": unif(ks[3], (H, 4 * H), H),
        "b_ih": unif(ks[4], (4 * H,), H),
        "b_hh": unif(ks[5], (4 * H,), H),
        "w_out": unif(ks[6], (H, E), H),
        "b_out": unif(ks[7], (E,), H),
        "w_mu": unif(ks[8], (E, L), E),
        "b_mu": unif(ks[9], (L,), E),
        "w_ls": unif(ks[10], (E, L), E),
        "b_ls": unif(ks[11], (L,), E),
    }


def pack_params(p):
    """Consolidate to 4 bf16 weight tensors + 1 packed f32 bias tensor."""
    H = p["w_embed"].shape[1]
    E = p["w_out"].shape[1]
    L = p["w_mu"].shape[1]
    w_embed = p["w_embed"].astype(jnp.bfloat16)
    w_lstm = jnp.concatenate([p["w_ih"], p["w_hh"]], axis=0).astype(jnp.bfloat16)
    w_out = p["w_out"].astype(jnp.bfloat16)
    w_head = jnp.concatenate([p["w_mu"], p["w_ls"]], axis=1).astype(jnp.bfloat16)
    bias = jnp.zeros((4, 4 * H), jnp.float32)
    bias = bias.at[0, :H].set(p["b_embed"])
    bias = bias.at[1, :].set(p["b_ih"] + p["b_hh"])
    bias = bias.at[2, :E].set(p["b_out"])
    bias = bias.at[3, :2 * L].set(jnp.concatenate([p["b_mu"], p["b_ls"]]))
    return w_embed, w_lstm, w_out, w_head, bias


def encoder_forward(x, eps, packed, *, b_tile=8):
    """x: (B, T, D) f32 sequence, eps: (B, L) f32 N(0,1) noise."""
    w_embed, w_lstm, w_out, w_head, bias = packed
    B, T, D = x.shape
    H = w_embed.shape[1]
    E = w_out.shape[1]
    L = w_head.shape[1] // 2

    b_tile = min(b_tile, B)
    assert B % b_tile == 0 and b_tile % 8 == 0, "batch tile must be a multiple of 8"

    # Time-major layout so the kernel's recurrence indexes timesteps on the
    # leading axis of its VMEM scratch (tiny one-off relayout).
    x_tm = jnp.transpose(x.astype(jnp.float32), (1, 0, 2))  # (T, B, D)

    out = pl.pallas_call(
        encoder_kernel,
        out_shape=jax.ShapeDtypeStruct((B, 3 * L), jnp.float32),
        grid_spec=pltpu.PrefetchScalarGridSpec(
            num_scalar_prefetch=0,
            grid=(B // b_tile,),
            in_specs=[
                pl.BlockSpec((T, b_tile, D), lambda b: (0, b, 0)),   # x (time-major)
                pl.BlockSpec((b_tile, L), lambda b: (b, 0)),         # eps
                # Weights / biases: constant block index -> fetched once,
                # VMEM-resident across all batch tiles.
                pl.BlockSpec((D, H), lambda b: (0, 0)),
                pl.BlockSpec((2 * H, 4 * H), lambda b: (0, 0)),
                pl.BlockSpec((H, E), lambda b: (0, 0)),
                pl.BlockSpec((E, 2 * L), lambda b: (0, 0)),
                pl.BlockSpec((4, 4 * H), lambda b: (0, 0)),
            ],
            out_specs=pl.BlockSpec((b_tile, 3 * L), lambda b: (b, 0)),
            scratch_shapes=[pltpu.VMEM((T, b_tile, 4 * H), jnp.float32)],
        ),
        compiler_params=pltpu.CompilerParams(
            dimension_semantics=("parallel",)),
    )(x_tm, eps, w_embed, w_lstm, w_out, w_head, bias)

    sample, mu, std = out[:, :L], out[:, L:2 * L], out[:, 2 * L:]
    # TODO(synk): torch.distributions.Normal (the `density` object) has no
    # Pallas equivalent; (mu, std) fully parameterize it and are returned.
    return sample, mu, std


def encoder_reference(x, eps, p):
    """Pure-JAX f32 reference of the PyTorch Encoder.forward."""
    B, T, D = x.shape
    H = p["w_embed"].shape[1]
    e = x.reshape(-1, D) @ p["w_embed"] + p["b_embed"]
    e = e.reshape(B, T, H)
    h = jnp.zeros((B, H), jnp.float32)
    c = jnp.zeros((B, H), jnp.float32)
    for t in range(T):
        g = e[:, t, :] @ p["w_ih"] + p["b_ih"] + h @ p["w_hh"] + p["b_hh"]
        i = jax.nn.sigmoid(g[:, :H])
        f = jax.nn.sigmoid(g[:, H:2 * H])
        gg = jnp.tanh(g[:, 2 * H:3 * H])
        o = jax.nn.sigmoid(g[:, 3 * H:])
        c = f * c + i * gg
        h = o * jnp.tanh(c)
    o_enc = jax.nn.relu(h @ p["w_out"] + p["b_out"])
    mu = o_enc @ p["w_mu"] + p["b_mu"]
    log_std = o_enc @ p["w_ls"] + p["b_ls"]
    std = jnp.exp(jnp.clip(log_std, LOG_STD_MIN, LOG_STD_MAX))
    return mu + std * eps, mu, std


if __name__ == "__main__":
    B, T, D = 16, 8, 32            # batch, sequence length, input_dim
    H, E, L = 128, 64, 12          # lstm_hidden, enc_size, latent_dim

    key = jax.random.PRNGKey(0)
    kx, ke, kp = jax.random.split(key, 3)
    x = jax.random.normal(kx, (B, T, D), jnp.float32)
    eps = jax.random.normal(ke, (B, L), jnp.float32)
    params = make_params(kp, D, H, E, L)
    packed = pack_params(params)

    sample, mu, std = encoder_forward(x, eps, packed, b_tile=8)
    jax.block_until_ready((sample, mu, std))

    assert sample.shape == (B, L) and mu.shape == (B, L) and std.shape == (B, L)
    assert bool(jnp.all(std > 0))
    assert bool(jnp.all(jnp.isfinite(sample)))

    # bf16-matmul kernel vs f32 pure-JAX reference (loose tolerance).
    ref_s, ref_mu, ref_std = encoder_reference(x, eps, params)
    assert bool(jnp.allclose(mu, ref_mu, rtol=5e-2, atol=5e-2))
    assert bool(jnp.allclose(std, ref_std, rtol=5e-2, atol=5e-2))
    assert bool(jnp.allclose(sample, ref_s, rtol=5e-2, atol=5e-2))

    print("KERNEL_OK")
</pallas_src>

<mosaic_0001>
module attributes {stable_mosaic.version = 11 : i64} {
  func.func @encoder_kernel(%arg0: i32, %arg1: memref<8x8x32xf32, #tpu.memory_space<vmem>>, %arg2: memref<8x12xf32, #tpu.memory_space<vmem>>, %arg3: memref<32x128xbf16, #tpu.memory_space<vmem>>, %arg4: memref<256x512xbf16, #tpu.memory_space<vmem>>, %arg5: memref<128x64xbf16, #tpu.memory_space<vmem>>, %arg6: memref<64x24xbf16, #tpu.memory_space<vmem>>, %arg7: memref<4x512xf32, #tpu.memory_space<vmem>>, %arg8: memref<8x36xf32, #tpu.memory_space<vmem>>, %arg9: memref<8x8x512xf32, #tpu.memory_space<vmem>>) attributes {dimension_semantics = [#tpu.dimension_semantics<parallel>], iteration_bounds = array<i64: 2>, scalar_prefetch = 0 : i64, scratch_operands = 1 : i64, tpu.core_type = #tpu.core_type<tc>, window_params = [{transform_indices = @transform_0, window_bounds = array<i64: 8, 8, 32>}, {transform_indices = @transform_1, window_bounds = array<i64: 8, 12>}, {pipeline_mode = #tpu.pipeline_mode<synchronous>, transform_indices = @transform_2, window_bounds = array<i64: 32, 128>}, {pipeline_mode = #tpu.pipeline_mode<synchronous>, transform_indices = @transform_3, window_bounds = array<i64: 256, 512>}, {pipeline_mode = #tpu.pipeline_mode<synchronous>, transform_indices = @transform_4, window_bounds = array<i64: 128, 64>}, {pipeline_mode = #tpu.pipeline_mode<synchronous>, transform_indices = @transform_5, window_bounds = array<i64: 64, 24>}, {pipeline_mode = #tpu.pipeline_mode<synchronous>, transform_indices = @transform_6, window_bounds = array<i64: 4, 512>}, {transform_indices = @transform_7, window_bounds = array<i64: 8, 36>}]} {
    %c0 = arith.constant 0 : index
    %c0_0 = arith.constant 0 : index
    %0 = vector.load %arg7[%c0, %c0_0] : memref<4x512xf32, #tpu.memory_space<vmem>>, vector<1x128xf32>
    %c1 = arith.constant 1 : index
    %c0_1 = arith.constant 0 : index
    %1 = vector.load %arg7[%c1, %c0_1] : memref<4x512xf32, #tpu.memory_space<vmem>>, vector<1x512xf32>
    %c2 = arith.constant 2 : index
    %c0_2 = arith.constant 0 : index
    %2 = vector.load %arg7[%c2, %c0_2] : memref<4x512xf32, #tpu.memory_space<vmem>>, vector<1x64xf32>
    %c3 = arith.constant 3 : index
    %c0_3 = arith.constant 0 : index
    %3 = vector.load %arg7[%c3, %c0_3] : memref<4x512xf32, #tpu.memory_space<vmem>>, vector<1x24xf32>
    %c0_4 = arith.constant 0 : index
    %c0_5 = arith.constant 0 : index
    %c0_6 = arith.constant 0 : index
    %4 = vector.load %arg1[%c0_4, %c0_5, %c0_6] : memref<8x8x32xf32, #tpu.memory_space<vmem>>, vector<8x8x32xf32>
    %5 = vector.shape_cast %4 : vector<8x8x32xf32> to vector<64x32xf32>
    %6 = arith.truncf %5 : vector<64x32xf32> to vector<64x32xbf16>
    %c0_7 = arith.constant 0 : index
    %c0_8 = arith.constant 0 : index
    %7 = vector.load %arg3[%c0_7, %c0_8] : memref<32x128xbf16, #tpu.memory_space<vmem>>, vector<32x128xbf16>
    %cst = arith.constant dense<0.000000e+00> : vector<64x128xf32>
    %8 = tpu.matmul %6, %7, %cst {dimension_numbers = #tpu.dot_dimension_numbers<[1], [0], [0], [1], [0, 0, 1, 1], [], []>} : vector<64x32xbf16>, vector<32x128xbf16>, vector<64x128xf32> -> vector<64x128xf32>
    %9 = vector.broadcast %0 : vector<1x128xf32> to vector<64x128xf32>
    %10 = arith.addf %8, %9 : vector<64x128xf32>
    %11 = arith.truncf %10 : vector<64x128xf32> to vector<64x128xbf16>
    %c0_9 = arith.constant 0 : index
    %c0_10 = arith.constant 0 : index
    %12 = vector.load %arg4[%c0_9, %c0_10] : memref<256x512xbf16, #tpu.memory_space<vmem>>, vector<128x512xbf16>
    %cst_11 = arith.constant dense<0.000000e+00> : vector<64x512xf32>
    %13 = tpu.matmul %11, %12, %cst_11 {dimension_numbers = #tpu.dot_dimension_numbers<[1], [0], [0], [1], [0, 0, 1, 1], [], []>} : vector<64x128xbf16>, vector<128x512xbf16>, vector<64x512xf32> -> vector<64x512xf32>
    %14 = vector.broadcast %1 : vector<1x512xf32> to vector<64x512xf32>
    %15 = arith.addf %13, %14 : vector<64x512xf32>
    %16 = vector.shape_cast %15 : vector<64x512xf32> to vector<8x8x512xf32>
    %c0_12 = arith.constant 0 : index
    %c0_13 = arith.constant 0 : index
    %c0_14 = arith.constant 0 : index
    %17 = vector.load %arg9[%c0_12, %c0_13, %c0_14] : memref<8x8x512xf32, #tpu.memory_space<vmem>>, vector<8x8x512xf32>
    tpu.vector_store %arg9[%c0_12, %c0_13, %c0_14], %16 {strides = array<i32>} : memref<8x8x512xf32, #tpu.memory_space<vmem>>, vector<8x8x512xf32>,
    %cst_15 = arith.constant 0.000000e+00 : f32
    %18 = vector.broadcast %cst_15 : f32 to vector<8x128xf32>
    %c0_i32 = arith.constant 0 : i32
    %19 = arith.index_cast %c0_i32 : i32 to index
    %c0_16 = arith.constant 0 : index
    %c0_17 = arith.constant 0 : index
    %20 = vector.load %arg9[%19, %c0_16, %c0_17] : memref<8x8x512xf32, #tpu.memory_space<vmem>>, vector<1x8x512xf32>
    %21 = vector.shape_cast %20 : vector<1x8x512xf32> to vector<8x512xf32>
    %22 = arith.truncf %18 : vector<8x128xf32> to vector<8x128xbf16>
    %c128 = arith.constant 128 : index
    %c0_18 = arith.constant 0 : index
    %23 = vector.load %arg4[%c128, %c0_18] : memref<256x512xbf16, #tpu.memory_space<vmem>>, vector<128x512xbf16>
    %cst_19 = arith.constant dense<0.000000e+00> : vector<8x512xf32>
    %24 = tpu.matmul %22, %23, %cst_19 {dimension_numbers = #tpu.dot_dimension_numbers<[1], [0], [0], [1], [0, 0, 1, 1], [], []>} : vector<8x128xbf16>, vector<128x512xbf16>, vector<8x512xf32> -> vector<8x512xf32>
    %25 = arith.addf %21, %24 : vector<8x512xf32>
    %26 = vector.extract_strided_slice %25 {offsets = [0, 0], sizes = [8, 128], strides = [1, 1]} : vector<8x512xf32> to vector<8x128xf32>
    %cst_20 = arith.constant 0.000000e+00 : f32
    %27 = vector.broadcast %cst_20 : f32 to vector<8x128xf32>
    %28 = arith.subf %27, %26 : vector<8x128xf32>
    %29 = math.exp %28 : vector<8x128xf32>
    %cst_21 = arith.constant 1.000000e+00 : f32
    %30 = vector.broadcast %cst_21 : f32 to vector<8x128xf32>
    %31 = arith.addf %30, %29 : vector<8x128xf32>
    %cst_22 = arith.constant 1.000000e+00 : f32
    %32 = vector.broadcast %cst_22 : f32 to vector<8x128xf32>
    %33 = arith.divf %32, %31 : vector<8x128xf32>
    %34 = vector.extract_strided_slice %25 {offsets = [0, 128], sizes = [8, 128], strides = [1, 1]} : vector<8x512xf32> to vector<8x128xf32>
    %cst_23 = arith.constant 0.000000e+00 : f32
    %35 = vector.broadcast %cst_23 : f32 to vector<8x128xf32>
    %36 = arith.subf %35, %34 : vector<8x128xf32>
    %37 = math.exp %36 : vector<8x128xf32>
    %cst_24 = arith.constant 1.000000e+00 : f32
    %38 = vector.broadcast %cst_24 : f32 to vector<8x128xf32>
    %39 = arith.addf %38, %37 : vector<8x128xf32>
    %cst_25 = arith.constant 1.000000e+00 : f32
    %40 = vector.broadcast %cst_25 : f32 to vector<8x128xf32>
    %41 = arith.divf %40, %39 : vector<8x128xf32>
    %42 = vector.extract_strided_slice %25 {offsets = [0, 256], sizes = [8, 128], strides = [1, 1]} : vector<8x512xf32> to vector<8x128xf32>
    %43 = math.tanh %42 : vector<8x128xf32>
    %44 = vector.extract_strided_slice %25 {offsets = [0, 384], sizes = [8, 128], strides = [1, 1]} : vector<8x512xf32> to vector<8x128xf32>
    %cst_26 = arith.constant 0.000000e+00 : f32
    %45 = vector.broadcast %cst_26 : f32 to vector<8x128xf32>
    %46 = arith.subf %45, %44 : vector<8x128xf32>
    %47 = math.exp %46 : vector<8x128xf32>
    %cst_27 = arith.constant 1.000000e+00 : f32
    %48 = vector.broadcast %cst_27 : f32 to vector<8x128xf32>
    %49 = arith.addf %48, %47 : vector<8x128xf32>
    %cst_28 = arith.constant 1.000000e+00 : f32
    %50 = vector.broadcast %cst_28 : f32 to vector<8x128xf32>
    %51 = arith.divf %50, %49 : vector<8x128xf32>
    %52 = arith.mulf %41, %18 : vector<8x128xf32>
    %53 = arith.mulf %33, %43 : vector<8x128xf32>
    %54 = arith.addf %52, %53 : vector<8x128xf32>
    %55 = math.tanh %54 : vector<8x128xf32>
    %56 = arith.mulf %51, %55 : vector<8x128xf32>
    %c1_i32 = arith.constant 1 : i32
    %57 = arith.index_cast %c1_i32 : i32 to index
    %c0_29 = arith.constant 0 : index
    %c0_30 = arith.constant 0 : index
    %58 = vector.load %arg9[%57, %c0_29, %c0_30] : memref<8x8x512xf32, #tpu.memory_space<vmem>>, vector<1x8x512xf32>
    %59 = vector.shape_cast %58 : vector<1x8x512xf32> to vector<8x512xf32>
    %60 = arith.truncf %56 : vector<8x128xf32> to vector<8x128xbf16>
    %c128_31 = arith.constant 128 : index
    %c0_32 = arith.constant 0 : index
    %61 = vector.load %arg4[%c128_31, %c0_32] : memref<256x512xbf16, #tpu.memory_space<vmem>>, vector<128x512xbf16>
    %cst_33 = arith.constant dense<0.000000e+00> : vector<8x512xf32>
    %62 = tpu.matmul %60, %61, %cst_33 {dimension_numbers = #tpu.dot_dimension_numbers<[1], [0], [0], [1], [0, 0, 1, 1], [], []>} : vector<8x128xbf16>, vector<128x512xbf16>, vector<8x512xf32> -> vector<8x512xf32>
    %63 = arith.addf %59, %62 : vector<8x512xf32>
    %64 = vector.extract_strided_slice %63 {offsets = [0, 0], sizes = [8, 128], strides = [1, 1]} : vector<8x512xf32> to vector<8x128xf32>
    %cst_34 = arith.constant 0.000000e+00 : f32
    %65 = vector.broadcast %cst_34 : f32 to vector<8x128xf32>
    %66 = arith.subf %65, %64 : vector<8x128xf32>
    %67 = math.exp %66 : vector<8x128xf32>
    %cst_35 = arith.constant 1.000000e+00 : f32
    %68 = vector.broadcast %cst_35 : f32 to vector<8x128xf32>
    %69 = arith.addf %68, %67 : vector<8x128xf32>
    %cst_36 = arith.constant 1.000000e+00 : f32
    %70 = vector.broadcast %cst_36 : f32 to vector<8x128xf32>
    %71 = arith.divf %70, %69 : vector<8x128xf32>
    %72 = vector.extract_strided_slice %63 {offsets = [0, 128], sizes = [8, 128], strides = [1, 1]} : vector<8x512xf32> to vector<8x128xf32>
    %cst_37 = arith.constant 0.000000e+00 : f32
    %73 = vector.broadcast %cst_37 : f32 to vector<8x128xf32>
    %74 = arith.subf %73, %72 : vector<8x128xf32>
    %75 = math.exp %74 : vector<8x128xf32>
    %cst_38 = arith.constant 1.000000e+00 : f32
    %76 = vector.broadcast %cst_38 : f32 to vector<8x128xf32>
    %77 = arith.addf %76, %75 : vector<8x128xf32>
    %cst_39 = arith.constant 1.000000e+00 : f32
    %78 = vector.broadcast %cst_39 : f32 to vector<8x128xf32>
    %79 = arith.divf %78, %77 : vector<8x128xf32>
    %80 = vector.extract_strided_slice %63 {offsets = [0, 256], sizes = [8, 128], strides = [1, 1]} : vector<8x512xf32> to vector<8x128xf32>
    %81 = math.tanh %80 : vector<8x128xf32>
    %82 = vector.extract_strided_slice %63 {offsets = [0, 384], sizes = [8, 128], strides = [1, 1]} : vector<8x512xf32> to vector<8x128xf32>
    %cst_40 = arith.constant 0.000000e+00 : f32
    %83 = vector.broadcast %cst_40 : f32 to vector<8x128xf32>
    %84 = arith.subf %83, %82 : vector<8x128xf32>
    %85 = math.exp %84 : vector<8x128xf32>
    %cst_41 = arith.constant 1.000000e+00 : f32
    %86 = vector.broadcast %cst_41 : f32 to vector<8x128xf32>
    %87 = arith.addf %86, %85 : vector<8x128xf32>
    %cst_42 = arith.constant 1.000000e+00 : f32
    %88 = vector.broadcast %cst_42 : f32 to vector<8x128xf32>
    %89 = arith.divf %88, %87 : vector<8x128xf32>
    %90 = arith.mulf %79, %54 : vector<8x128xf32>
    %91 = arith.mulf %71, %81 : vector<8x128xf32>
    %92 = arith.addf %90, %91 : vector<8x128xf32>
    %93 = math.tanh %92 : vector<8x128xf32>
    %94 = arith.mulf %89, %93 : vector<8x128xf32>
    %c2_i32 = arith.constant 2 : i32
    %95 = arith.index_cast %c2_i32 : i32 to index
    %c0_43 = arith.constant 0 : index
    %c0_44 = arith.constant 0 : index
    %96 = vector.load %arg9[%95, %c0_43, %c0_44] : memref<8x8x512xf32, #tpu.memory_space<vmem>>, vector<1x8x512xf32>
    %97 = vector.shape_cast %96 : vector<1x8x512xf32> to vector<8x512xf32>
    %98 = arith.truncf %94 : vector<8x128xf32> to vector<8x128xbf16>
    %c128_45 = arith.constant 128 : index
    %c0_46 = arith.constant 0 : index
    %99 = vector.load %arg4[%c128_45, %c0_46] : memref<256x512xbf16, #tpu.memory_space<vmem>>, vector<128x512xbf16>
    %cst_47 = arith.constant dense<0.000000e+00> : vector<8x512xf32>
    %100 = tpu.matmul %98, %99, %cst_47 {dimension_numbers = #tpu.dot_dimension_numbers<[1], [0], [0], [1], [0, 0, 1, 1], [], []>} : vector<8x128xbf16>, vector<128x512xbf16>, vector<8x512xf32> -> vector<8x512xf32>
    %101 = arith.addf %97, %100 : vector<8x512xf32>
    %102 = vector.extract_strided_slice %101 {offsets = [0, 0], sizes = [8, 128], strides = [1, 1]} : vector<8x512xf32> to vector<8x128xf32>
    %cst_48 = arith.constant 0.000000e+00 : f32
    %103 = vector.broadcast %cst_48 : f32 to vector<8x128xf32>
    %104 = arith.subf %103, %102 : vector<8x128xf32>
    %105 = math.exp %104 : vector<8x128xf32>
    %cst_49 = arith.constant 1.000000e+00 : f32
    %106 = vector.broadcast %cst_49 : f32 to vector<8x128xf32>
    %107 = arith.addf %106, %105 : vector<8x128xf32>
    %cst_50 = arith.constant 1.000000e+00 : f32
    %108 = vector.broadcast %cst_50 : f32 to vector<8x128xf32>
    %109 = arith.divf %108, %107 : vector<8x128xf32>
    %110 = vector.extract_strided_slice %101 {offsets = [0, 128], sizes = [8, 128], strides = [1, 1]} : vector<8x512xf32> to vector<8x128xf32>
    %cst_51 = arith.constant 0.000000e+00 : f32
    %111 = vector.broadcast %cst_51 : f32 to vector<8x128xf32>
    %112 = arith.subf %111, %110 : vector<8x128xf32>
    %113 = math.exp %112 : vector<8x128xf32>
    %cst_52 = arith.constant 1.000000e+00 : f32
    %114 = vector.broadcast %cst_52 : f32 to vector<8x128xf32>
    %115 = arith.addf %114, %113 : vector<8x128xf32>
    %cst_53 = arith.constant 1.000000e+00 : f32
    %116 = vector.broadcast %cst_53 : f32 to vector<8x128xf32>
    %117 = arith.divf %116, %115 : vector<8x128xf32>
    %118 = vector.extract_strided_slice %101 {offsets = [0, 256], sizes = [8, 128], strides = [1, 1]} : vector<8x512xf32> to vector<8x128xf32>
    %119 = math.tanh %118 : vector<8x128xf32>
    %120 = vector.extract_strided_slice %101 {offsets = [0, 384], sizes = [8, 128], strides = [1, 1]} : vector<8x512xf32> to vector<8x128xf32>
    %cst_54 = arith.constant 0.000000e+00 : f32
    %121 = vector.broadcast %cst_54 : f32 to vector<8x128xf32>
    %122 = arith.subf %121, %120 : vector<8x128xf32>
    %123 = math.exp %122 : vector<8x128xf32>
    %cst_55 = arith.constant 1.000000e+00 : f32
    %124 = vector.broadcast %cst_55 : f32 to vector<8x128xf32>
    %125 = arith.addf %124, %123 : vector<8x128xf32>
    %cst_56 = arith.constant 1.000000e+00 : f32
    %126 = vector.broadcast %cst_56 : f32 to vector<8x128xf32>
    %127 = arith.divf %126, %125 : vector<8x128xf32>
    %128 = arith.mulf %117, %92 : vector<8x128xf32>
    %129 = arith.mulf %109, %119 : vector<8x128xf32>
    %130 = arith.addf %128, %129 : vector<8x128xf32>
    %131 = math.tanh %130 : vector<8x128xf32>
    %132 = arith.mulf %127, %131 : vector<8x128xf32>
    %c3_i32 = arith.constant 3 : i32
    %133 = arith.index_cast %c3_i32 : i32 to index
    %c0_57 = arith.constant 0 : index
    %c0_58 = arith.constant 0 : index
    %134 = vector.load %arg9[%133, %c0_57, %c0_58] : memref<8x8x512xf32, #tpu.memory_space<vmem>>, vector<1x8x512xf32>
    %135 = vector.shape_cast %134 : vector<1x8x512xf32> to vector<8x512xf32>
    %136 = arith.truncf %132 : vector<8x128xf32> to vector<8x128xbf16>
    %c128_59 = arith.constant 128 : index
    %c0_60 = arith.constant 0 : index
    %137 = vector.load %arg4[%c128_59, %c0_60] : memref<256x512xbf16, #tpu.memory_space<vmem>>, vector<128x512xbf16>
    %cst_61 = arith.constant dense<0.000000e+00> : vector<8x512xf32>
    %138 = tpu.matmul %136, %137, %cst_61 {dimension_numbers = #tpu.dot_dimension_numbers<[1], [0], [0], [1], [0, 0, 1, 1], [], []>} : vector<8x128xbf16>, vector<128x512xbf16>, vector<8x512xf32> -> vector<8x512xf32>
    %139 = arith.addf %135, %138 : vector<8x512xf32>
    %140 = vector.extract_strided_slice %139 {offsets = [0, 0], sizes = [8, 128], strides = [1, 1]} : vector<8x512xf32> to vector<8x128xf32>
    %cst_62 = arith.constant 0.000000e+00 : f32
    %141 = vector.broadcast %cst_62 : f32 to vector<8x128xf32>
    %142 = arith.subf %141, %140 : vector<8x128xf32>
    %143 = math.exp %142 : vector<8x128xf32>
    %cst_63 = arith.constant 1.000000e+00 : f32
    %144 = vector.broadcast %cst_63 : f32 to vector<8x128xf32>
    %145 = arith.addf %144, %143 : vector<8x128xf32>
    %cst_64 = arith.constant 1.000000e+00 : f32
    %146 = vector.broadcast %cst_64 : f32 to vector<8x128xf32>
    %147 = arith.divf %146, %145 : vector<8x128xf32>
    %148 = vector.extract_strided_slice %139 {offsets = [0, 128], sizes = [8, 128], strides = [1, 1]} : vector<8x512xf32> to vector<8x128xf32>
    %cst_65 = arith.constant 0.000000e+00 : f32
    %149 = vector.broadcast %cst_65 : f32 to vector<8x128xf32>
    %150 = arith.subf %149, %148 : vector<8x128xf32>
    %151 = math.exp %150 : vector<8x128xf32>
    %cst_66 = arith.constant 1.000000e+00 : f32
    %152 = vector.broadcast %cst_66 : f32 to vector<8x128xf32>
    %153 = arith.addf %152, %151 : vector<8x128xf32>
    %cst_67 = arith.constant 1.000000e+00 : f32
    %154 = vector.broadcast %cst_67 : f32 to vector<8x128xf32>
    %155 = arith.divf %154, %153 : vector<8x128xf32>
    %156 = vector.extract_strided_slice %139 {offsets = [0, 256], sizes = [8, 128], strides = [1, 1]} : vector<8x512xf32> to vector<8x128xf32>
    %157 = math.tanh %156 : vector<8x128xf32>
    %158 = vector.extract_strided_slice %139 {offsets = [0, 384], sizes = [8, 128], strides = [1, 1]} : vector<8x512xf32> to vector<8x128xf32>
    %cst_68 = arith.constant 0.000000e+00 : f32
    %159 = vector.broadcast %cst_68 : f32 to vector<8x128xf32>
    %160 = arith.subf %159, %158 : vector<8x128xf32>
    %161 = math.exp %160 : vector<8x128xf32>
    %cst_69 = arith.constant 1.000000e+00 : f32
    %162 = vector.broadcast %cst_69 : f32 to vector<8x128xf32>
    %163 = arith.addf %162, %161 : vector<8x128xf32>
    %cst_70 = arith.constant 1.000000e+00 : f32
    %164 = vector.broadcast %cst_70 : f32 to vector<8x128xf32>
    %165 = arith.divf %164, %163 : vector<8x128xf32>
    %166 = arith.mulf %155, %130 : vector<8x128xf32>
    %167 = arith.mulf %147, %157 : vector<8x128xf32>
    %168 = arith.addf %166, %167 : vector<8x128xf32>
    %169 = math.tanh %168 : vector<8x128xf32>
    %170 = arith.mulf %165, %169 : vector<8x128xf32>
    %c4_i32 = arith.constant 4 : i32
    %171 = arith.index_cast %c4_i32 : i32 to index
    %c0_71 = arith.constant 0 : index
    %c0_72 = arith.constant 0 : index
    %172 = vector.load %arg9[%171, %c0_71, %c0_72] : memref<8x8x512xf32, #tpu.memory_space<vmem>>, vector<1x8x512xf32>
    %173 = vector.shape_cast %172 : vector<1x8x512xf32> to vector<8x512xf32>
    %174 = arith.truncf %170 : vector<8x128xf32> to vector<8x128xbf16>
    %c128_73 = arith.constant 128 : index
    %c0_74 = arith.constant 0 : index
    %175 = vector.load %arg4[%c128_73, %c0_74] : memref<256x512xbf16, #tpu.memory_space<vmem>>, vector<128x512xbf16>
    %cst_75 = arith.constant dense<0.000000e+00> : vector<8x512xf32>
    %176 = tpu.matmul %174, %175, %cst_75 {dimension_numbers = #tpu.dot_dimension_numbers<[1], [0], [0], [1], [0, 0, 1, 1], [], []>} : vector<8x128xbf16>, vector<128x512xbf16>, vector<8x512xf32> -> vector<8x512xf32>
    %177 = arith.addf %173, %176 : vector<8x512xf32>
    %178 = vector.extract_strided_slice %177 {offsets = [0, 0], sizes = [8, 128], strides = [1, 1]} : vector<8x512xf32> to vector<8x128xf32>
    %cst_76 = arith.constant 0.000000e+00 : f32
    %179 = vector.broadcast %cst_76 : f32 to vector<8x128xf32>
    %180 = arith.subf %179, %178 : vector<8x128xf32>
    %181 = math.exp %180 : vector<8x128xf32>
    %cst_77 = arith.constant 1.000000e+00 : f32
    %182 = vector.broadcast %cst_77 : f32 to vector<8x128xf32>
    %183 = arith.addf %182, %181 : vector<8x128xf32>
    %cst_78 = arith.constant 1.000000e+00 : f32
    %184 = vector.broadcast %cst_78 : f32 to vector<8x128xf32>
    %185 = arith.divf %184, %183 : vector<8x128xf32>
    %186 = vector.extract_strided_slice %177 {offsets = [0, 128], sizes = [8, 128], strides = [1, 1]} : vector<8x512xf32> to vector<8x128xf32>
    %cst_79 = arith.constant 0.000000e+00 : f32
    %187 = vector.broadcast %cst_79 : f32 to vector<8x128xf32>
    %188 = arith.subf %187, %186 : vector<8x128xf32>
    %189 = math.exp %188 : vector<8x128xf32>
    %cst_80 = arith.constant 1.000000e+00 : f32
    %190 = vector.broadcast %cst_80 : f32 to vector<8x128xf32>
    %191 = arith.addf %190, %189 : vector<8x128xf32>
    %cst_81 = arith.constant 1.000000e+00 : f32
    %192 = vector.broadcast %cst_81 : f32 to vector<8x128xf32>
    %193 = arith.divf %192, %191 : vector<8x128xf32>
    %194 = vector.extract_strided_slice %177 {offsets = [0, 256], sizes = [8, 128], strides = [1, 1]} : vector<8x512xf32> to vector<8x128xf32>
    %195 = math.tanh %194 : vector<8x128xf32>
    %196 = vector.extract_strided_slice %177 {offsets = [0, 384], sizes = [8, 128], strides = [1, 1]} : vector<8x512xf32> to vector<8x128xf32>
    %cst_82 = arith.constant 0.000000e+00 : f32
    %197 = vector.broadcast %cst_82 : f32 to vector<8x128xf32>
    %198 = arith.subf %197, %196 : vector<8x128xf32>
    %199 = math.exp %198 : vector<8x128xf32>
    %cst_83 = arith.constant 1.000000e+00 : f32
    %200 = vector.broadcast %cst_83 : f32 to vector<8x128xf32>
    %201 = arith.addf %200, %199 : vector<8x128xf32>
    %cst_84 = arith.constant 1.000000e+00 : f32
    %202 = vector.broadcast %cst_84 : f32 to vector<8x128xf32>
    %203 = arith.divf %202, %201 : vector<8x128xf32>
    %204 = arith.mulf %193, %168 : vector<8x128xf32>
    %205 = arith.mulf %185, %195 : vector<8x128xf32>
    %206 = arith.addf %204, %205 : vector<8x128xf32>
    %207 = math.tanh %206 : vector<8x128xf32>
    %208 = arith.mulf %203, %207 : vector<8x128xf32>
    %c5_i32 = arith.constant 5 : i32
    %209 = arith.index_cast %c5_i32 : i32 to index
    %c0_85 = arith.constant 0 : index
    %c0_86 = arith.constant 0 : index
    %210 = vector.load %arg9[%209, %c0_85, %c0_86] : memref<8x8x512xf32, #tpu.memory_space<vmem>>, vector<1x8x512xf32>
    %211 = vector.shape_cast %210 : vector<1x8x512xf32> to vector<8x512xf32>
    %212 = arith.truncf %208 : vector<8x128xf32> to vector<8x128xbf16>
    %c128_87 = arith.constant 128 : index
    %c0_88 = arith.constant 0 : index
    %213 = vector.load %arg4[%c128_87, %c0_88] : memref<256x512xbf16, #tpu.memory_space<vmem>>, vector<128x512xbf16>
    %cst_89 = arith.constant dense<0.000000e+00> : vector<8x512xf32>
    %214 = tpu.matmul %212, %213, %cst_89 {dimension_numbers = #tpu.dot_dimension_numbers<[1], [0], [0], [1], [0, 0, 1, 1], [], []>} : vector<8x128xbf16>, vector<128x512xbf16>, vector<8x512xf32> -> vector<8x512xf32>
    %215 = arith.addf %211, %214 : vector<8x512xf32>
    %216 = vector.extract_strided_slice %215 {offsets = [0, 0], sizes = [8, 128], strides = [1, 1]} : vector<8x512xf32> to vector<8x128xf32>
    %cst_90 = arith.constant 0.000000e+00 : f32
    %217 = vector.broadcast %cst_90 : f32 to vector<8x128xf32>
    %218 = arith.subf %217, %216 : vector<8x128xf32>
    %219 = math.exp %218 : vector<8x128xf32>
    %cst_91 = arith.constant 1.000000e+00 : f32
    %220 = vector.broadcast %cst_91 : f32 to vector<8x128xf32>
    %221 = arith.addf %220, %219 : vector<8x128xf32>
    %cst_92 = arith.constant 1.000000e+00 : f32
    %222 = vector.broadcast %cst_92 : f32 to vector<8x128xf32>
    %223 = arith.divf %222, %221 : vector<8x128xf32>
    %224 = vector.extract_strided_slice %215 {offsets = [0, 128], sizes = [8, 128], strides = [1, 1]} : vector<8x512xf32> to vector<8x128xf32>
    %cst_93 = arith.constant 0.000000e+00 : f32
    %225 = vector.broadcast %cst_93 : f32 to vector<8x128xf32>
    %226 = arith.subf %225, %224 : vector<8x128xf32>
    %227 = math.exp %226 : vector<8x128xf32>
    %cst_94 = arith.constant 1.000000e+00 : f32
    %228 = vector.broadcast %cst_94 : f32 to vector<8x128xf32>
    %229 = arith.addf %228, %227 : vector<8x128xf32>
    %cst_95 = arith.constant 1.000000e+00 : f32
    %230 = vector.broadcast %cst_95 : f32 to vector<8x128xf32>
    %231 = arith.divf %230, %229 : vector<8x128xf32>
    %232 = vector.extract_strided_slice %215 {offsets = [0, 256], sizes = [8, 128], strides = [1, 1]} : vector<8x512xf32> to vector<8x128xf32>
    %233 = math.tanh %232 : vector<8x128xf32>
    %234 = vector.extract_strided_slice %215 {offsets = [0, 384], sizes = [8, 128], strides = [1, 1]} : vector<8x512xf32> to vector<8x128xf32>
    %cst_96 = arith.constant 0.000000e+00 : f32
    %235 = vector.broadcast %cst_96 : f32 to vector<8x128xf32>
    %236 = arith.subf %235, %234 : vector<8x128xf32>
    %237 = math.exp %236 : vector<8x128xf32>
    %cst_97 = arith.constant 1.000000e+00 : f32
    %238 = vector.broadcast %cst_97 : f32 to vector<8x128xf32>
    %239 = arith.addf %238, %237 : vector<8x128xf32>
    %cst_98 = arith.constant 1.000000e+00 : f32
    %240 = vector.broadcast %cst_98 : f32 to vector<8x128xf32>
    %241 = arith.divf %240, %239 : vector<8x128xf32>
    %242 = arith.mulf %231, %206 : vector<8x128xf32>
    %243 = arith.mulf %223, %233 : vector<8x128xf32>
    %244 = arith.addf %242, %243 : vector<8x128xf32>
    %245 = math.tanh %244 : vector<8x128xf32>
    %246 = arith.mulf %241, %245 : vector<8x128xf32>
    %c6_i32 = arith.constant 6 : i32
    %247 = arith.index_cast %c6_i32 : i32 to index
    %c0_99 = arith.constant 0 : index
    %c0_100 = arith.constant 0 : index
    %248 = vector.load %arg9[%247, %c0_99, %c0_100] : memref<8x8x512xf32, #tpu.memory_space<vmem>>, vector<1x8x512xf32>
    %249 = vector.shape_cast %248 : vector<1x8x512xf32> to vector<8x512xf32>
    %250 = arith.truncf %246 : vector<8x128xf32> to vector<8x128xbf16>
    %c128_101 = arith.constant 128 : index
    %c0_102 = arith.constant 0 : index
    %251 = vector.load %arg4[%c128_101, %c0_102] : memref<256x512xbf16, #tpu.memory_space<vmem>>, vector<128x512xbf16>
    %cst_103 = arith.constant dense<0.000000e+00> : vector<8x512xf32>
    %252 = tpu.matmul %250, %251, %cst_103 {dimension_numbers = #tpu.dot_dimension_numbers<[1], [0], [0], [1], [0, 0, 1, 1], [], []>} : vector<8x128xbf16>, vector<128x512xbf16>, vector<8x512xf32> -> vector<8x512xf32>
    %253 = arith.addf %249, %252 : vector<8x512xf32>
    %254 = vector.extract_strided_slice %253 {offsets = [0, 0], sizes = [8, 128], strides = [1, 1]} : vector<8x512xf32> to vector<8x128xf32>
    %cst_104 = arith.constant 0.000000e+00 : f32
    %255 = vector.broadcast %cst_104 : f32 to vector<8x128xf32>
    %256 = arith.subf %255, %254 : vector<8x128xf32>
    %257 = math.exp %256 : vector<8x128xf32>
    %cst_105 = arith.constant 1.000000e+00 : f32
    %258 = vector.broadcast %cst_105 : f32 to vector<8x128xf32>
    %259 = arith.addf %258, %257 : vector<8x128xf32>
    %cst_106 = arith.constant 1.000000e+00 : f32
    %260 = vector.broadcast %cst_106 : f32 to vector<8x128xf32>
    %261 = arith.divf %260, %259 : vector<8x128xf32>
    %262 = vector.extract_strided_slice %253 {offsets = [0, 128], sizes = [8, 128], strides = [1, 1]} : vector<8x512xf32> to vector<8x128xf32>
    %cst_107 = arith.constant 0.000000e+00 : f32
    %263 = vector.broadcast %cst_107 : f32 to vector<8x128xf32>
    %264 = arith.subf %263, %262 : vector<8x128xf32>
    %265 = math.exp %264 : vector<8x128xf32>
    %cst_108 = arith.constant 1.000000e+00 : f32
    %266 = vector.broadcast %cst_108 : f32 to vector<8x128xf32>
    %267 = arith.addf %266, %265 : vector<8x128xf32>
    %cst_109 = arith.constant 1.000000e+00 : f32
    %268 = vector.broadcast %cst_109 : f32 to vector<8x128xf32>
    %269 = arith.divf %268, %267 : vector<8x128xf32>
    %270 = vector.extract_strided_slice %253 {offsets = [0, 256], sizes = [8, 128], strides = [1, 1]} : vector<8x512xf32> to vector<8x128xf32>
    %271 = math.tanh %270 : vector<8x128xf32>
    %272 = vector.extract_strided_slice %253 {offsets = [0, 384], sizes = [8, 128], strides = [1, 1]} : vector<8x512xf32> to vector<8x128xf32>
    %cst_110 = arith.constant 0.000000e+00 : f32
    %273 = vector.broadcast %cst_110 : f32 to vector<8x128xf32>
    %274 = arith.subf %273, %272 : vector<8x128xf32>
    %275 = math.exp %274 : vector<8x128xf32>
    %cst_111 = arith.constant 1.000000e+00 : f32
    %276 = vector.broadcast %cst_111 : f32 to vector<8x128xf32>
    %277 = arith.addf %276, %275 : vector<8x128xf32>
    %cst_112 = arith.constant 1.000000e+00 : f32
    %278 = vector.broadcast %cst_112 : f32 to vector<8x128xf32>
    %279 = arith.divf %278, %277 : vector<8x128xf32>
    %280 = arith.mulf %269, %244 : vector<8x128xf32>
    %281 = arith.mulf %261, %271 : vector<8x128xf32>
    %282 = arith.addf %280, %281 : vector<8x128xf32>
    %283 = math.tanh %282 : vector<8x128xf32>
    %284 = arith.mulf %279, %283 : vector<8x128xf32>
    %c7_i32 = arith.constant 7 : i32
    %285 = arith.index_cast %c7_i32 : i32 to index
    %c0_113 = arith.constant 0 : index
    %c0_114 = arith.constant 0 : index
    %286 = vector.load %arg9[%285, %c0_113, %c0_114] : memref<8x8x512xf32, #tpu.memory_space<vmem>>, vector<1x8x512xf32>
    %287 = vector.shape_cast %286 : vector<1x8x512xf32> to vector<8x512xf32>
    %288 = arith.truncf %284 : vector<8x128xf32> to vector<8x128xbf16>
    %c128_115 = arith.constant 128 : index
    %c0_116 = arith.constant 0 : index
    %289 = vector.load %arg4[%c128_115, %c0_116] : memref<256x512xbf16, #tpu.memory_space<vmem>>, vector<128x512xbf16>
    %cst_117 = arith.constant dense<0.000000e+00> : vector<8x512xf32>
    %290 = tpu.matmul %288, %289, %cst_117 {dimension_numbers = #tpu.dot_dimension_numbers<[1], [0], [0], [1], [0, 0, 1, 1], [], []>} : vector<8x128xbf16>, vector<128x512xbf16>, vector<8x512xf32> -> vector<8x512xf32>
    %291 = arith.addf %287, %290 : vector<8x512xf32>
    %292 = vector.extract_strided_slice %291 {offsets = [0, 0], sizes = [8, 128], strides = [1, 1]} : vector<8x512xf32> to vector<8x128xf32>
    %cst_118 = arith.constant 0.000000e+00 : f32
    %293 = vector.broadcast %cst_118 : f32 to vector<8x128xf32>
    %294 = arith.subf %293, %292 : vector<8x128xf32>
    %295 = math.exp %294 : vector<8x128xf32>
    %cst_119 = arith.constant 1.000000e+00 : f32
    %296 = vector.broadcast %cst_119 : f32 to vector<8x128xf32>
    %297 = arith.addf %296, %295 : vector<8x128xf32>
    %cst_120 = arith.constant 1.000000e+00 : f32
    %298 = vector.broadcast %cst_120 : f32 to vector<8x128xf32>
    %299 = arith.divf %298, %297 : vector<8x128xf32>
    %300 = vector.extract_strided_slice %291 {offsets = [0, 128], sizes = [8, 128], strides = [1, 1]} : vector<8x512xf32> to vector<8x128xf32>
    %cst_121 = arith.constant 0.000000e+00 : f32
    %301 = vector.broadcast %cst_121 : f32 to vector<8x128xf32>
    %302 = arith.subf %301, %300 : vector<8x128xf32>
    %303 = math.exp %302 : vector<8x128xf32>
    %cst_122 = arith.constant 1.000000e+00 : f32
    %304 = vector.broadcast %cst_122 : f32 to vector<8x128xf32>
    %305 = arith.addf %304, %303 : vector<8x128xf32>
    %cst_123 = arith.constant 1.000000e+00 : f32
    %306 = vector.broadcast %cst_123 : f32 to vector<8x128xf32>
    %307 = arith.divf %306, %305 : vector<8x128xf32>
    %308 = vector.extract_strided_slice %291 {offsets = [0, 256], sizes = [8, 128], strides = [1, 1]} : vector<8x512xf32> to vector<8x128xf32>
    %309 = math.tanh %308 : vector<8x128xf32>
    %310 = vector.extract_strided_slice %291 {offsets = [0, 384], sizes = [8, 128], strides = [1, 1]} : vector<8x512xf32> to vector<8x128xf32>
    %cst_124 = arith.constant 0.000000e+00 : f32
    %311 = vector.broadcast %cst_124 : f32 to vector<8x128xf32>
    %312 = arith.subf %311, %310 : vector<8x128xf32>
    %313 = math.exp %312 : vector<8x128xf32>
    %cst_125 = arith.constant 1.000000e+00 : f32
    %314 = vector.broadcast %cst_125 : f32 to vector<8x128xf32>
    %315 = arith.addf %314, %313 : vector<8x128xf32>
    %cst_126 = arith.constant 1.000000e+00 : f32
    %316 = vector.broadcast %cst_126 : f32 to vector<8x128xf32>
    %317 = arith.divf %316, %315 : vector<8x128xf32>
    %318 = arith.mulf %307, %282 : vector<8x128xf32>
    %319 = arith.mulf %299, %309 : vector<8x128xf32>
    %320 = arith.addf %318, %319 : vector<8x128xf32>
    %321 = math.tanh %320 : vector<8x128xf32>
    %322 = arith.mulf %317, %321 : vector<8x128xf32>
    %c8_i32 = arith.constant 8 : i32
    %323 = arith.truncf %322 : vector<8x128xf32> to vector<8x128xbf16>
    %c0_127 = arith.constant 0 : index
    %c0_128 = arith.constant 0 : index
    %324 = vector.load %arg5[%c0_127, %c0_128] : memref<128x64xbf16, #tpu.memory_space<vmem>>, vector<128x64xbf16>
    %cst_129 = arith.constant dense<0.000000e+00> : vector<8x64xf32>
    %325 = tpu.matmul %323, %324, %cst_129 {dimension_numbers = #tpu.dot_dimension_numbers<[1], [0], [0], [1], [0, 0, 1, 1], [], []>} : vector<8x128xbf16>, vector<128x64xbf16>, vector<8x64xf32> -> vector<8x64xf32>
    %326 = vector.broadcast %2 : vector<1x64xf32> to vector<8x64xf32>
    %327 = arith.addf %325, %326 : vector<8x64xf32>
    %cst_130 = arith.constant 0.000000e+00 : f32
    %328 = vector.broadcast %cst_130 : f32 to vector<8x64xf32>
    %329 = arith.maximumf %327, %328 : vector<8x64xf32>
    %330 = arith.truncf %329 : vector<8x64xf32> to vector<8x64xbf16>
    %c0_131 = arith.constant 0 : index
    %c0_132 = arith.constant 0 : index
    %331 = vector.load %arg6[%c0_131, %c0_132] : memref<64x24xbf16, #tpu.memory_space<vmem>>, vector<64x24xbf16>
    %cst_133 = arith.constant dense<0.000000e+00> : vector<8x24xf32>
    %332 = tpu.matmul %330, %331, %cst_133 {dimension_numbers = #tpu.dot_dimension_numbers<[1], [0], [0], [1], [0, 0, 1, 1], [], []>} : vector<8x64xbf16>, vector<64x24xbf16>, vector<8x24xf32> -> vector<8x24xf32>
    %333 = vector.broadcast %3 : vector<1x24xf32> to vector<8x24xf32>
    %334 = arith.addf %332, %333 : vector<8x24xf32>
    %335 = vector.extract_strided_slice %334 {offsets = [0, 0], sizes = [8, 12], strides = [1, 1]} : vector<8x24xf32> to vector<8x12xf32>
    %336 = vector.extract_strided_slice %334 {offsets = [0, 12], sizes = [8, 12], strides = [1, 1]} : vector<8x24xf32> to vector<8x12xf32>
    %cst_134 = arith.constant -2.000000e+01 : f32
    %cst_135 = arith.constant 2.000000e+00 : f32
    %337 = vector.broadcast %cst_134 : f32 to vector<8x12xf32>
    %338 = arith.maximumf %337, %336 : vector<8x12xf32>
    %339 = vector.broadcast %cst_135 : f32 to vector<8x12xf32>
    %340 = arith.minimumf %339, %338 : vector<8x12xf32>
    %341 = math.exp %340 : vector<8x12xf32>
    %c0_136 = arith.constant 0 : index
    %c0_137 = arith.constant 0 : index
    %342 = vector.load %arg2[%c0_136, %c0_137] : memref<8x12xf32, #tpu.memory_space<vmem>>, vector<8x12xf32>
    %343 = arith.mulf %341, %342 : vector<8x12xf32>
    %344 = arith.addf %335, %343 : vector<8x12xf32>
    %345 = tpu.concatenate %344, %335, %341 in 1 : vector<8x12xf32>, vector<8x12xf32>, vector<8x12xf32> -> vector<8x36xf32>
    %c0_138 = arith.constant 0 : index
    %c0_139 = arith.constant 0 : index
    %346 = vector.load %arg8[%c0_138, %c0_139] : memref<8x36xf32, #tpu.memory_space<vmem>>, vector<8x36xf32>
    tpu.vector_store %arg8[%c0_138, %c0_139], %345 {strides = array<i32>} : memref<8x36xf32, #tpu.memory_space<vmem>>, vector<8x36xf32>,
    return
  }
  func.func @transform_0(%arg0: i32) -> (i32, i32, i32) {
    %c0_i32 = arith.constant 0 : i32
    %c0_i32_0 = arith.constant 0 : i32
    %c0_i32_1 = arith.constant 0 : i32
    return %c0_i32, %arg0, %c0_i32_0 : i32, i32, i32
  }
  func.func @transform_1(%arg0: i32) -> (i32, i32) {
    %c0_i32 = arith.constant 0 : i32
    %c0_i32_0 = arith.constant 0 : i32
    return %arg0, %c0_i32 : i32, i32
  }
  func.func @transform_2(%arg0: i32) -> (i32, i32) {
    %c0_i32 = arith.constant 0 : i32
    %c0_i32_0 = arith.constant 0 : i32
    %c0_i32_1 = arith.constant 0 : i32
    return %c0_i32, %c0_i32_0 : i32, i32
  }
  func.func @transform_3(%arg0: i32) -> (i32, i32) {
    %c0_i32 = arith.constant 0 : i32
    %c0_i32_0 = arith.constant 0 : i32
    %c0_i32_1 = arith.constant 0 : i32
    return %c0_i32, %c0_i32_0 : i32, i32
  }
  func.func @transform_4(%arg0: i32) -> (i32, i32) {
    %c0_i32 = arith.constant 0 : i32
    %c0_i32_0 = arith.constant 0 : i32
    %c0_i32_1 = arith.constant 0 : i32
    return %c0_i32, %c0_i32_0 : i32, i32
  }
  func.func @transform_5(%arg0: i32) -> (i32, i32) {
    %c0_i32 = arith.constant 0 : i32
    %c0_i32_0 = arith.constant 0 : i32
    %c0_i32_1 = arith.constant 0 : i32
    return %c0_i32, %c0_i32_0 : i32, i32
  }
  func.func @transform_6(%arg0: i32) -> (i32, i32) {
    %c0_i32 = arith.constant 0 : i32
    %c0_i32_0 = arith.constant 0 : i32
    %c0_i32_1 = arith.constant 0 : i32
    return %c0_i32, %c0_i32_0 : i32, i32
  }
  func.func @transform_7(%arg0: i32) -> (i32, i32) {
    %c0_i32 = arith.constant 0 : i32
    %c0_i32_0 = arith.constant 0 : i32
    return %arg0, %c0_i32 : i32, i32
  }
}

</mosaic_0001>

<llo_original>
// kernel: tpu_custom_call.1
$region0: #{tpu_custom_call.1}
  #allocation0 [shape = 'u32[]', space=smem, size = 0x4, offset = 0x4, fixed_abs, tag = 'smem constant byte address 0x4 - core index']
  #allocation1 [shape = 'u32[72,128]{1,0:T(1,128)}', space=vmem, size = 0x9000, scoped, tag = 'internal scratch']
  #allocation2 [shape = 'f32[8,8,512]{2,1,0:T(8,128)}', space=vmem, size = 0x20000, scoped, tag = 'scratch operand']
  %s0 = inlined_call_operand.hbm [shape: f32[8,16,32], index: 0, kind: input, shape index: {}]
  %s1 = inlined_call_operand.vmem [shape: f32[16,12], index: 1, kind: input, shape index: {}]
  %s2 = inlined_call_operand.vmem [shape: bf16[32,128], index: 2, kind: input, shape index: {}]
  %s3 = inlined_call_operand.hbm [shape: bf16[256,512], index: 3, kind: input, shape index: {}]
  %s4 = inlined_call_operand.vmem [shape: bf16[128,64], index: 4, kind: input, shape index: {}]
  %s5 = inlined_call_operand.vmem [shape: bf16[64,24], index: 5, kind: input, shape index: {}]
  %s6 = inlined_call_operand.vmem [shape: f32[4,512], index: 6, kind: input, shape index: {}]
  %s7 = inlined_call_operand.hbm [shape: f32[16,36], index: 7, kind: output, shape index: {}]
  %s8 = sld [smem:[#allocation0]]
  $region69: #{tpu_custom_call.1} parent=0
    _
  %s10 = ssub.s32 1, %s8
  %s11 = scalar_select 0, %s10, %s8
  $region1: #{tpu_custom_call.1} parent=0
    #allocation3 [shape = 'u8[65536]{0}', space=vmem, size = 0x10000, scoped, tag = 'input window, operand 0']
    #allocation4 [shape = 's32[2]{0}', space=sflag, size = 0x8, scoped, tag = 'scoped memory for tpu_custom_call.1']
    #allocation5 [shape = 's32[2]{0}', space=sflag, size = 0x8, scoped, tag = 'scoped memory for tpu_custom_call.1']
    #allocation6 [shape = 'u8[262144]{0}', space=vmem, size = 0x40000, scoped, tag = 'input window, operand 3, single buffered']
    #allocation7 [shape = 's32[1]{0}', space=sflag, size = 0x4, scoped, tag = 'scoped memory for tpu_custom_call.1']
    #allocation8 [shape = 'u8[8192]{0}', space=vmem, size = 0x2000, scoped, tag = 'output window, operand 0']
    %12 = vsyncpa [#allocation4], 0
    %s13 = scalar_lea.sflag [#allocation4], 1
    %14 = vsyncpa %s13, 0
    %15 = vsyncpa [#allocation7], 0
    %16 = vsyncpa [#allocation5], 0
    %s17 = scalar_lea.sflag [#allocation5], 1
    %18 = vsyncpa %s17, 0
    loop: start=0, step=1, limit=4
    $region2: #{tpu_custom_call.1} parent=1 // loop_pre_header
      _
    $region3: #{tpu_custom_call.1} parent=1 // loop_header
      %s20 = sphi 0, %s24
      %p21 = scmp.ge.s32.totalorder %s20, 4
      %s30 = sphi 0, %s32
      %s33 = sphi 0, %s30
      %s34 = sphi 0, %s33
      %s50 = sphi 0, %s34
      %s56 = sphi 0, %s58
      %s59 = sphi 0, %s56
      %s60 = sphi 0, %s59
      %s76 = sphi 0, %s60
      %s80 = sphi 0, %s80
      %s82 = sphi 0, %s80
      %s83 = sphi 0, %s82
      %s97 = sphi 0, %s83
      %s101 = sphi 0, %s101
      %s103 = sphi 0, %s101
      %s104 = sphi 0, %s103
      %s118 = sphi 0, %s104
      %s122 = sphi 0, %s122
      %s124 = sphi 0, %s122
      %s125 = sphi 0, %s124
      %s139 = sphi 0, %s125
      %s143 = sphi 0, %s143
      %s145 = sphi 0, %s143
      %s146 = sphi 0, %s145
      %s160 = sphi 0, %s146
      %s164 = sphi 0, %s164
      %s166 = sphi 0, %s164
      %s167 = sphi 0, %s166
      %s181 = sphi 0, %s167
      %s187 = sphi 0, %s189
      %s190 = sphi 0, %s187
      %s191 = sphi 0, %s190
      %s207 = sphi 0, %s191
    $region4: #{tpu_custom_call.1} parent=1 // loop_header_branch
      %23 = sbr.rel (%p21) target = $region8
    $region5: #{tpu_custom_call.1} parent=1 // loop_body
      %s25 = ssub.s32 %s20, 1
      %s26 = ssub.s32 %s20, 2
      %s27 = sadd.s32 %s20, 1
      %s28 = ssub.s32 %s20, %s27
      %p29 = scmp.eq.s32.totalorder %s28, 0
      %s31 = sadd.s32 %s30, 1
      %s32 = scalar_select %p29, %s30, %s31
      %p35 = pneg %p29
      %p36 = scmp.eq.s32.totalorder %s20, 1
      %p37 = por %p35, %p36
      %p38 = scmp.ne.s32.totalorder %s30, %s33
      %p39 = scmp.eq.s32.totalorder %s20, 0
      %p40 = por %p38, %p39
      %p41 = scmp.ne.s32.totalorder %s30, %s33
      %p42 = scmp.eq.s32.totalorder %s25, 1
      %p43 = por %p41, %p42
      %p44 = scmp.ne.s32.totalorder %s33, %s34
      %p45 = scmp.eq.s32.totalorder %s25, 0
      %p46 = por %p44, %p45
      %p47 = scmp.ne.s32.totalorder %s33, %s34
      %p48 = scmp.eq.s32.totalorder %s26, 1
      %p49 = por %p47, %p48
      %p51 = scmp.ne.s32.totalorder %s34, %s50
      %p52 = scmp.eq.s32.totalorder %s26, 0
      %p53 = por %p51, %p52
      %s54 = ssub.s32 %s20, %s27
      %p55 = scmp.eq.s32.totalorder %s54, 0
      %s57 = sadd.s32 %s56, 1
      %s58 = scalar_select %p55, %s56, %s57
      %p61 = pneg %p55
      %p62 = scmp.eq.s32.totalorder %s20, 1
      %p63 = por %p61, %p62
      %p64 = scmp.ne.s32.totalorder %s56, %s59
      %p65 = scmp.eq.s32.totalorder %s20, 0
      %p66 = por %p64, %p65
      %p67 = scmp.ne.s32.totalorder %s56, %s59
      %p68 = scmp.eq.s32.totalorder %s25, 1
      %p69 = por %p67, %p68
      %p70 = scmp.ne.s32.totalorder %s59, %s60
      %p71 = scmp.eq.s32.totalorder %s25, 0
      %p72 = por %p70, %p71
      %p73 = scmp.ne.s32.totalorder %s59, %s60
      %p74 = scmp.eq.s32.totalorder %s26, 1
      %p75 = por %p73, %p74
      %p77 = scmp.ne.s32.totalorder %s60, %s76
      %p78 = scmp.eq.s32.totalorder %s26, 0
      %p79 = por %p77, %p78
      %s81 = sadd.s32 %s80, 1
      %p84 = scmp.eq.s32.totalorder %s20, 1
      %p85 = scmp.ne.s32.totalorder %s80, %s82
      %p86 = scmp.eq.s32.totalorder %s20, 0
      %p87 = por %p85, %p86
      %p88 = scmp.ne.s32.totalorder %s80, %s82
      %p89 = scmp.eq.s32.totalorder %s25, 1
      %p90 = por %p88, %p89
      %p91 = scmp.ne.s32.totalorder %s82, %s83
      %p92 = scmp.eq.s32.totalorder %s25, 0
      %p93 = por %p91, %p92
      %p94 = scmp.ne.s32.totalorder %s82, %s83
      %p95 = scmp.eq.s32.totalorder %s26, 1
      %p96 = por %p94, %p95
      %p98 = scmp.ne.s32.totalorder %s83, %s97
      %p99 = scmp.eq.s32.totalorder %s26, 0
      %p100 = por %p98, %p99
      %s102 = sadd.s32 %s101, 1
      %p105 = scmp.eq.s32.totalorder %s20, 1
      %p106 = scmp.ne.s32.totalorder %s101, %s103
      %p107 = scmp.eq.s32.totalorder %s20, 0
      %p108 = por %p106, %p107
      %p109 = scmp.ne.s32.totalorder %s101, %s103
      %p110 = scmp.eq.s32.totalorder %s25, 1
      %p111 = por %p109, %p110
      %p112 = scmp.ne.s32.totalorder %s103, %s104
      %p113 = scmp.eq.s32.totalorder %s25, 0
      %p114 = por %p112, %p113
      %p115 = scmp.ne.s32.totalorder %s103, %s104
      %p116 = scmp.eq.s32.totalorder %s26, 1
      %p117 = por %p115, %p116
      %p119 = scmp.ne.s32.totalorder %s104, %s118
      %p120 = scmp.eq.s32.totalorder %s26, 0
      %p121 = por %p119, %p120
      %s123 = sadd.s32 %s122, 1
      %p126 = scmp.eq.s32.totalorder %s20, 1
      %p127 = scmp.ne.s32.totalorder %s122, %s124
      %p128 = scmp.eq.s32.totalorder %s20, 0
      %p129 = por %p127, %p128
      %p130 = scmp.ne.s32.totalorder %s122, %s124
      %p131 = scmp.eq.s32.totalorder %s25, 1
      %p132 = por %p130, %p131
      %p133 = scmp.ne.s32.totalorder %s124, %s125
      %p134 = scmp.eq.s32.totalorder %s25, 0
      %p135 = por %p133, %p134
      %p136 = scmp.ne.s32.totalorder %s124, %s125
      %p137 = scmp.eq.s32.totalorder %s26, 1
      %p138 = por %p136, %p137
      %p140 = scmp.ne.s32.totalorder %s125, %s139
      %p141 = scmp.eq.s32.totalorder %s26, 0
      %p142 = por %p140, %p141
      %s144 = sadd.s32 %s143, 1
      %p147 = scmp.eq.s32.totalorder %s20, 1
      %p148 = scmp.ne.s32.totalorder %s143, %s145
      %p149 = scmp.eq.s32.totalorder %s20, 0
      %p150 = por %p148, %p149
      %p151 = scmp.ne.s32.totalorder %s143, %s145
      %p152 = scmp.eq.s32.totalorder %s25, 1
      %p153 = por %p151, %p152
      %p154 = scmp.ne.s32.totalorder %s145, %s146
      %p155 = scmp.eq.s32.totalorder %s25, 0
      %p156 = por %p154, %p155
      %p157 = scmp.ne.s32.totalorder %s145, %s146
      %p158 = scmp.eq.s32.totalorder %s26, 1
      %p159 = por %p157, %p158
      %p161 = scmp.ne.s32.totalorder %s146, %s160
      %p162 = scmp.eq.s32.totalorder %s26, 0
      %p163 = por %p161, %p162
      %s165 = sadd.s32 %s164, 1
      %p168 = scmp.eq.s32.totalorder %s20, 1
      %p169 = scmp.ne.s32.totalorder %s164, %s166
      %p170 = scmp.eq.s32.totalorder %s20, 0
      %p171 = por %p169, %p170
      %p172 = scmp.ne.s32.totalorder %s164, %s166
      %p173 = scmp.eq.s32.totalorder %s25, 1
      %p174 = por %p172, %p173
      %p175 = scmp.ne.s32.totalorder %s166, %s167
      %p176 = scmp.eq.s32.totalorder %s25, 0
      %p177 = por %p175, %p176
      %p178 = scmp.ne.s32.totalorder %s166, %s167
      %p179 = scmp.eq.s32.totalorder %s26, 1
      %p180 = por %p178, %p179
      %p182 = scmp.ne.s32.totalorder %s167, %s181
      %p183 = scmp.eq.s32.totalorder %s26, 0
      %p184 = por %p182, %p183
      %s185 = ssub.s32 %s20, %s27
      %p186 = scmp.eq.s32.totalorder %s185, 0
      %s188 = sadd.s32 %s187, 1
      %s189 = scalar_select %p186, %s187, %s188
      %p192 = pneg %p186
      %p193 = scmp.eq.s32.totalorder %s20, 1
      %p194 = por %p192, %p193
      %p195 = scmp.ne.s32.totalorder %s187, %s190
      %p196 = scmp.eq.s32.totalorder %s20, 0
      %p197 = por %p195, %p196
      %p198 = scmp.ne.s32.totalorder %s187, %s190
      %p199 = scmp.eq.s32.totalorder %s25, 1
      %p200 = por %p198, %p199
      %p201 = scmp.ne.s32.totalorder %s190, %s191
      %p202 = scmp.eq.s32.totalorder %s25, 0
      %p203 = por %p201, %p202
      %p204 = scmp.ne.s32.totalorder %s190, %s191
      %p205 = scmp.eq.s32.totalorder %s26, 1
      %p206 = por %p204, %p205
      %p208 = scmp.ne.s32.totalorder %s191, %s207
      %p209 = scmp.eq.s32.totalorder %s26, 0
      %p210 = por %p208, %p209
      %p211 = scmp.le.s32.totalorder 1, %s20
      %p212 = scmp.lt.s32.totalorder %s20, 3
      %p213 = pnand %p211, %p212
      %p214 = pneg %p213
      // Predicated region
      $region9: #{tpu_custom_call.1} parent=5 // pred_check
        _
      $region10: #{tpu_custom_call.1} parent=5 // pred_check_branch
        %216 = sbr.rel (%p213) target = $region12
      $region11: #{tpu_custom_call.1} parent=5 // pred_region
        %s217 = ssub.s32 %s20, 1
        // Predicated region
        $region13: #{tpu_custom_call.1} parent=11 // pred_check
          %p218 = pneg %p93
        $region14: #{tpu_custom_call.1} parent=11 // pred_check_branch
          %220 = sbr.rel (%p218) target = $region16
        $region15: #{tpu_custom_call.1} parent=11 // pred_region
          _
        $region16: #{tpu_custom_call.1} parent=11 // pred_fallthru
          _
        // Predicated region
        $region17: #{tpu_custom_call.1} parent=11 // pred_check
          %p221 = pneg %p114
        $region18: #{tpu_custom_call.1} parent=11 // pred_check_branch
          %223 = sbr.rel (%p221) target = $region20
        $region19: #{tpu_custom_call.1} parent=11 // pred_region
          %225 = vsyncadd [#allocation7], 0
          %s226 = sshll.u32 %s3, 4
          %s227 = int_to_ptr.hbm [resolvable:$true] %s226
          %s228 = sshll.u32 [#allocation6], 4
          %s229 = int_to_ptr.vmem [resolvable:$true] %s228
          %234 = dma.hbm_to_vmem [thread:$0]  %s227, 8192, %s229, [#allocation7], 256, 256, 16
        $region20: #{tpu_custom_call.1} parent=11 // pred_fallthru
          _
        // Predicated region
        $region21: #{tpu_custom_call.1} parent=11 // pred_check
          %p235 = pneg %p135
        $region22: #{tpu_custom_call.1} parent=11 // pred_check_branch
          %237 = sbr.rel (%p235) target = $region24
        $region23: #{tpu_custom_call.1} parent=11 // pred_region
          _
        $region24: #{tpu_custom_call.1} parent=11 // pred_fallthru
          _
        // Predicated region
        $region25: #{tpu_custom_call.1} parent=11 // pred_check
          %p238 = pneg %p156
        $region26: #{tpu_custom_call.1} parent=11 // pred_check_branch
          %240 = sbr.rel (%p238) target = $region28
        $region27: #{tpu_custom_call.1} parent=11 // pred_region
          _
        $region28: #{tpu_custom_call.1} parent=11 // pred_fallthru
          _
        // Predicated region
        $region29: #{tpu_custom_call.1} parent=11 // pred_check
          %p241 = pneg %p177
        $region30: #{tpu_custom_call.1} parent=11 // pred_check_branch
          %243 = sbr.rel (%p241) target = $region32
        $region31: #{tpu_custom_call.1} parent=11 // pred_region
          _
        $region32: #{tpu_custom_call.1} parent=11 // pred_fallthru
          _
      $region12: #{tpu_custom_call.1} parent=5 // pred_fallthru
        _
      %p244 = scmp.lt.s32.totalorder %s20, 2
      // Predicated region
      $region33: #{tpu_custom_call.1} parent=5 // pred_check
        %p245 = pneg %p244
      $region34: #{tpu_custom_call.1} parent=5 // pred_check_branch
        %247 = sbr.rel (%p245) target = $region36
      $region35: #{tpu_custom_call.1} parent=5 // pred_region
        // Predicated region
        $region37: #{tpu_custom_call.1} parent=35 // pred_check
          %p248 = pneg %p40
        $region38: #{tpu_custom_call.1} parent=35 // pred_check_branch
          %250 = sbr.rel (%p248) target = $region40
        $region39: #{tpu_custom_call.1} parent=35 // pred_region
          %s251 = sand.u32 %s30, 1
          %s252 = scalar_lea.sflag [#allocation4], %s251
          %s253 = sand.u32 %s30, 1
          %s254 = smul.addr %s253, 64
          %s255 = scalar_lea.vmem [#allocation3], %s254
          %257 = vsyncadd %s252, 0
          %s258 = smul.addr %s20, 8
          %s259 = scalar_lea.hbm %s0, %s258
          %s260 = sshll.u32 %s259, 4
          %s261 = int_to_ptr.hbm [resolvable:$true] %s260
          %s262 = sshll.u32 %s255, 4
          %s263 = int_to_ptr.vmem [resolvable:$true] %s262
          %268 = dma.hbm_to_vmem [thread:$0]  %s261, 1024, %s263, %s252, 256, 128, 8
        $region40: #{tpu_custom_call.1} parent=35 // pred_fallthru
          _
        // Predicated region
        $region41: #{tpu_custom_call.1} parent=35 // pred_check
          %p269 = pneg %p66
        $region42: #{tpu_custom_call.1} parent=35 // pred_check_branch
          %271 = sbr.rel (%p269) target = $region44
        $region43: #{tpu_custom_call.1} parent=35 // pred_region
          %p272 = scmp.lt.s32.totalorder %s20, 1
          %s273 = scalar_select %p272, %s20, 1
          %s274 = smul.addr %s273, 8
          %s275 = scalar_lea.vmem %s1, %s274
        $region44: #{tpu_custom_call.1} parent=35 // pred_fallthru
          _
      $region36: #{tpu_custom_call.1} parent=5 // pred_fallthru
        _
      %p276 = scmp.le.s32.totalorder 1, %s20
      %p277 = scmp.lt.s32.totalorder %s20, 3
      %p278 = pnand %p276, %p277
      %p279 = pneg %p278
      // Predicated region
      $region45: #{tpu_custom_call.1} parent=5 // pred_check
        _
      $region46: #{tpu_custom_call.1} parent=5 // pred_check_branch
        %281 = sbr.rel (%p278) target = $region48
      $region47: #{tpu_custom_call.1} parent=5 // pred_region
        %s282 = ssub.s32 %s20, 1
        %s283 = sand.u32 %s33, 1
        %s284 = scalar_lea.sflag [#allocation4], %s283
        %s285 = sand.u32 %s33, 1
        %s286 = smul.addr %s285, 64
        %s287 = scalar_lea.vmem [#allocation3], %s286
        // Predicated region
        $region49: #{tpu_custom_call.1} parent=47 // pred_check
          %p288 = pneg %p46
        $region50: #{tpu_custom_call.1} parent=47 // pred_check_branch
          %290 = sbr.rel (%p288) target = $region52
        $region51: #{tpu_custom_call.1} parent=47 // pred_region
          %292 = dma.done %s284, 1024
        $region52: #{tpu_custom_call.1} parent=47 // pred_fallthru
          _
        // Predicated region
        $region53: #{tpu_custom_call.1} parent=47 // pred_check
          %p293 = pneg %p114
        $region54: #{tpu_custom_call.1} parent=47 // pred_check_branch
          %295 = sbr.rel (%p293) target = $region56
        $region55: #{tpu_custom_call.1} parent=47 // pred_region
          %297 = dma.done [#allocation7], 8192
        $region56: #{tpu_custom_call.1} parent=47 // pred_fallthru
          _
        %s298 = sand.u32 %s33, 1
        %s299 = scalar_lea.sflag [#allocation4], %s298
        %s300 = sand.u32 %s33, 1
        %s301 = smul.addr %s300, 64
        %s302 = scalar_lea.vmem [#allocation3], %s301
        %p303 = pneg %p46
        %p304 = pneg %p43
        %p305 = scmp.lt.s32.totalorder %s25, 1
        %s306 = scalar_select %p305, %s25, 1
        %s307 = smul.addr %s306, 8
        %s308 = scalar_lea.vmem %s1, %s307
        %p309 = pneg %p72
        %p310 = pneg %p69
        %p311 = pneg %p93
        %p312 = pneg %p90
        %p313 = pneg %p114
        %p314 = pneg %p111
        %p315 = pneg %p135
        %p316 = pneg %p132
        %p317 = pneg %p156
        %p318 = pneg %p153
        %p319 = pneg %p177
        %p320 = pneg %p174
        %p321 = pneg %p203
        %p322 = pneg %p200
        %s323 = sand.u32 %s190, 1
        %s324 = scalar_lea.sflag [#allocation5], %s323
        %s325 = sand.u32 %s190, 1
        %s326 = smul.addr %s325, 8
        %s327 = scalar_lea.vmem [#allocation8], %s326
        %p328 = scmp.lt.s32.totalorder %s25, 1
        %s329 = scalar_select %p328, %s25, 1
        %s330 = smul.addr %s329, 8
        %s331 = scalar_lea.vmem %s1, %s330
        %v333 = vld [vmem:[%s6] sm:$0x1]
        %s334 = scalar_lea.vmem %s6, 1
        %v335 = vld [vmem:[%s334] ss:$4 sm:$0xf]
        %v336 = vld [vmem:[%s6 + $0x2] sm:$0x1]
        %v337 = vld [vmem:[%s6 + $0x3] sm:$0x1]
        %v338 = vld [vmem:[%s287] sm:$0xff]
        %v339 = vld [vmem:[%s287 + $0x8] sm:$0xff]
        %v340 = vld [vmem:[%s287 + $0x10] sm:$0xff]
        %v341 = vld [vmem:[%s287 + $0x18] sm:$0xff]
        %v342 = vld [vmem:[%s287 + $0x20] sm:$0xff]
        %v343 = vld [vmem:[%s287 + $0x28] sm:$0xff]
        %v344 = vld [vmem:[%s287 + $0x30] sm:$0xff]
        %v345 = vld [vmem:[%s287 + $0x38] sm:$0xff]
        %v346 = vpack.c.bf16 %v339, %v338
        %v347 = vpack.c.bf16 %v341, %v340
        %v348 = vpack.c.bf16 %v343, %v342
        %v349 = vpack.c.bf16 %v345, %v344
        %v350 = vld [vmem:[%s2] sm:$0xf]
        %v351 = vld [vmem:[%s2 + $0x4] sm:$0xf]
        %v352 = vld [vmem:[%s2 + $0x8] sm:$0xf]
        %v353 = vld [vmem:[%s2 + $0xc] sm:$0xf]
        %v354 = vperm.slane %v333, 0
        %v359 = vunpack.c.l.b16 %v350
        %v360 = vunpack.c.l.b16 %v351
        %v361 = vunpack.c.l.b16 %v352
        %v362 = vunpack.c.l.b16 %v353
        %v363 = vpack.c.b16 %v360, %v359
        %v364 = vpack.c.b16 %v362, %v361
        %vm367 = vcmask 261120
        %v369 = vsel %vm367, %v346, 0
        %v372 = vsel %vm367, %v347, 0
        %v375 = vsel %vm367, %v348, 0
        %v378 = vsel %vm367, %v349, 0
        %380 = vmatpush.bf16.msra.mxu0 0
        %381 = vmatpush.bf16.msra.mxu0 0
        %382 = vmatpush.bf16.msra.mxu0 0
        %383 = vmatpush.bf16.msra.mxu0 0
        %384 = vmatpush.bf16.msra.mxu0 0
        %385 = vmatpush.bf16.msra.mxu0 0
        %386 = vmatpush.bf16.msra.mxu0 %v364
        %387 = vmatpush.bf16.msra.mxu0 %v363
        %388 = vmatmul.bf16.gmra.mxu0 %v369
        %v389 = vpop.f32.mrf.mxu0
        %v390 = vadd.f32 %v354, %v389
        %v391 = vpop.f32.mrf.mxu0
        %v392 = vadd.f32 %v354, %v391
        %393 = vmatmul.bf16.gmra.mxu0 %v372
        %v394 = vpop.f32.mrf.mxu0
        %v395 = vadd.f32 %v354, %v394
        %v396 = vpop.f32.mrf.mxu0
        %v397 = vadd.f32 %v354, %v396
        %398 = vmatmul.bf16.gmra.mxu0 %v375
        %v399 = vpop.f32.mrf.mxu0
        %v400 = vadd.f32 %v354, %v399
        %v401 = vpop.f32.mrf.mxu0
        %v402 = vadd.f32 %v354, %v401
        %403 = vmatmul.bf16.gmra.mxu0 %v378
        %v404 = vpop.f32.mrf.mxu0
        %v405 = vadd.f32 %v354, %v404
        %v406 = vpop.f32.mrf.mxu0
        %v407 = vadd.f32 %v354, %v406
        %408 = vdwg.mxu0
        %v409 = vpack.c.bf16 %v392, %v390
        %v410 = vpack.c.bf16 %v397, %v395
        %v411 = vpack.c.bf16 %v402, %v400
        %v412 = vpack.c.bf16 %v407, %v405
        %v413 = vld [vmem:[#allocation6] sm:$0xff]
        %v414 = vld [vmem:[#allocation6 + $0x8] sm:$0xff]
        %v415 = vld [vmem:[#allocation6 + $0x10] sm:$0xff]
        %v416 = vld [vmem:[#allocation6 + $0x18] sm:$0xff]
        %v417 = vld [vmem:[#allocation6 + $0x20] sm:$0xff]
        %v418 = vld [vmem:[#allocation6 + $0x28] sm:$0xff]
        %v419 = vld [vmem:[#allocation6 + $0x30] sm:$0xff]
        %v420 = vld [vmem:[#allocation6 + $0x38] sm:$0xff]
        %v421 = vld [vmem:[#allocation6 + $0x40] sm:$0xff]
        %v422 = vld [vmem:[#allocation6 + $0x48] sm:$0xff]
        %v423 = vld [vmem:[#allocation6 + $0x50] sm:$0xff]
        %v424 = vld [vmem:[#allocation6 + $0x58] sm:$0xff]
        %v425 = vld [vmem:[#allocation6 + $0x60] sm:$0xff]
        %v426 = vld [vmem:[#allocation6 + $0x68] sm:$0xff]
        %v427 = vld [vmem:[#allocation6 + $0x70] sm:$0xff]
        %v428 = vld [vmem:[#allocation6 + $0x78] sm:$0xff]
        %v429 = vld [vmem:[#allocation6 + $0x80] sm:$0xff]
        %v430 = vld [vmem:[#allocation6 + $0x88] sm:$0xff]
        %v431 = vld [vmem:[#allocation6 + $0x90] sm:$0xff]
        %v432 = vld [vmem:[#allocation6 + $0x98] sm:$0xff]
        %v433 = vld [vmem:[#allocation6 + $0xa0] sm:$0xff]
        %v434 = vld [vmem:[#allocation6 + $0xa8] sm:$0xff]
        %v435 = vld [vmem:[#allocation6 + $0xb0] sm:$0xff]
        %v436 = vld [vmem:[#allocation6 + $0xb8] sm:$0xff]
        %v437 = vld [vmem:[#allocation6 + $0xc0] sm:$0xff]
        %v438 = vld [vmem:[#allocation6 + $0xc8] sm:$0xff]
        %v439 = vld [vmem:[#allocation6 + $0xd0] sm:$0xff]
        %v440 = vld [vmem:[#allocation6 + $0xd8] sm:$0xff]
        %v441 = vld [vmem:[#allocation6 + $0xe0] sm:$0xff]
        %v442 = vld [vmem:[#allocation6 + $0xe8] sm:$0xff]
        %v443 = vld [vmem:[#allocation6 + $0xf0] sm:$0xff]
        %v444 = vld [vmem:[#allocation6 + $0xf8] sm:$0xff]
        %v446 = vperm.slane %v335, 0
        %v447 = vperm.slane %v335, 1
        %v448 = vperm.slane %v335, 2
        %v449 = vperm.slane %v335, 3
        %v486 = vunpack.c.l.b16 %v413
        %v487 = vunpack.c.h.b16 %v413
        %v488 = vunpack.c.l.b16 %v414
        %v489 = vunpack.c.h.b16 %v414
        %v490 = vunpack.c.l.b16 %v415
        %v491 = vunpack.c.h.b16 %v415
        %v492 = vunpack.c.l.b16 %v416
        %v493 = vunpack.c.h.b16 %v416
        %v494 = vunpack.c.l.b16 %v417
        %v495 = vunpack.c.h.b16 %v417
        %v496 = vunpack.c.l.b16 %v418
        %v497 = vunpack.c.h.b16 %v418
        %v498 = vunpack.c.l.b16 %v419
        %v499 = vunpack.c.h.b16 %v419
        %v500 = vunpack.c.l.b16 %v420
        %v501 = vunpack.c.h.b16 %v420
        %v502 = vunpack.c.l.b16 %v421
        %v503 = vunpack.c.h.b16 %v421
        %v504 = vunpack.c.l.b16 %v422
        %v505 = vunpack.c.h.b16 %v422
        %v506 = vunpack.c.l.b16 %v423
        %v507 = vunpack.c.h.b16 %v423
        %v508 = vunpack.c.l.b16 %v424
        %v509 = vunpack.c.h.b16 %v424
        %v510 = vunpack.c.l.b16 %v425
        %v511 = vunpack.c.h.b16 %v425
        %v512 = vunpack.c.l.b16 %v426
        %v513 = vunpack.c.h.b16 %v426
        %v514 = vunpack.c.l.b16 %v427
        %v515 = vunpack.c.h.b16 %v427
        %v516 = vunpack.c.l.b16 %v428
        %v517 = vunpack.c.h.b16 %v428
        %v518 = vunpack.c.l.b16 %v429
        %v519 = vunpack.c.h.b16 %v429
        %v520 = vunpack.c.l.b16 %v430
        %v521 = vunpack.c.h.b16 %v430
        %v522 = vunpack.c.l.b16 %v431
        %v523 = vunpack.c.h.b16 %v431
        %v524 = vunpack.c.l.b16 %v432
        %v525 = vunpack.c.h.b16 %v432
        %v526 = vunpack.c.l.b16 %v433
        %v527 = vunpack.c.h.b16 %v433
        %v528 = vunpack.c.l.b16 %v434
        %v529 = vunpack.c.h.b16 %v434
        %v530 = vunpack.c.l.b16 %v435
        %v531 = vunpack.c.h.b16 %v435
        %v532 = vunpack.c.l.b16 %v436
        %v533 = vunpack.c.h.b16 %v436
        %v534 = vunpack.c.l.b16 %v437
        %v535 = vunpack.c.h.b16 %v437
        %v536 = vunpack.c.l.b16 %v438
        %v537 = vunpack.c.h.b16 %v438
        %v538 = vunpack.c.l.b16 %v439
        %v539 = vunpack.c.h.b16 %v439
        %v540 = vunpack.c.l.b16 %v440
        %v541 = vunpack.c.h.b16 %v440
        %v542 = vunpack.c.l.b16 %v441
        %v543 = vunpack.c.h.b16 %v441
        %v544 = vunpack.c.l.b16 %v442
        %v545 = vunpack.c.h.b16 %v442
        %v546 = vunpack.c.l.b16 %v443
        %v547 = vunpack.c.h.b16 %v443
        %v548 = vunpack.c.l.b16 %v444
        %v549 = vunpack.c.h.b16 %v444
        %v550 = vpack.c.b16 %v490, %v486
        %v551 = vpack.c.b16 %v491, %v487
        %v552 = vpack.c.b16 %v492, %v488
        %v553 = vpack.c.b16 %v493, %v489
        %v554 = vpack.c.b16 %v498, %v494
        %v555 = vpack.c.b16 %v499, %v495
        %v556 = vpack.c.b16 %v500, %v496
        %v557 = vpack.c.b16 %v501, %v497
        %v558 = vpack.c.b16 %v506, %v502
        %v559 = vpack.c.b16 %v507, %v503
        %v560 = vpack.c.b16 %v508, %v504
        %v561 = vpack.c.b16 %v509, %v505
        %v562 = vpack.c.b16 %v514, %v510
        %v563 = vpack.c.b16 %v515, %v511
        %v564 = vpack.c.b16 %v516, %v512
        %v565 = vpack.c.b16 %v517, %v513
        %v566 = vpack.c.b16 %v522, %v518
        %v567 = vpack.c.b16 %v523, %v519
        %v568 = vpack.c.b16 %v524, %v520
        %v569 = vpack.c.b16 %v525, %v521
        %v570 = vpack.c.b16 %v530, %v526
        %v571 = vpack.c.b16 %v531, %v527
        %v572 = vpack.c.b16 %v532, %v528
        %v573 = vpack.c.b16 %v533, %v529
        %v574 = vpack.c.b16 %v538, %v534
        %v575 = vpack.c.b16 %v539, %v535
        %v576 = vpack.c.b16 %v540, %v536
        %v577 = vpack.c.b16 %v541, %v537
        %v578 = vpack.c.b16 %v546, %v542
        %v579 = vpack.c.b16 %v547, %v543
        %v580 = vpack.c.b16 %v548, %v544
        %v581 = vpack.c.b16 %v549, %v545
        %614 = vmatpush.bf16.msra.mxu0 %v578
        %615 = vmatpush.bf16.msra.mxu0 %v574
        %616 = vmatpush.bf16.msra.mxu0 %v570
        %617 = vmatpush.bf16.msra.mxu0 %v566
        %618 = vmatpush.bf16.msra.mxu0 %v562
        %619 = vmatpush.bf16.msra.mxu0 %v558
        %620 = vmatpush.bf16.msra.mxu0 %v554
        %621 = vmatpush.bf16.msra.mxu0 %v550
        %622 = vmatmul.bf16.gmra.mxu0 %v409
        %v623 = vpop.f32.mrf.mxu0
        %v624 = vadd.f32 %v446, %v623
        %v625 = vpop.f32.mrf.mxu0
        %v626 = vadd.f32 %v446, %v625
        %627 = vmatmul.bf16.gmra.mxu0 %v410
        %v628 = vpop.f32.mrf.mxu0
        %v629 = vadd.f32 %v446, %v628
        %v630 = vpop.f32.mrf.mxu0
        %v631 = vadd.f32 %v446, %v630
        %632 = vmatmul.bf16.gmra.mxu0 %v411
        %v633 = vpop.f32.mrf.mxu0
        %v634 = vadd.f32 %v446, %v633
        %v635 = vpop.f32.mrf.mxu0
        %v636 = vadd.f32 %v446, %v635
        %637 = vmatmul.bf16.gmra.mxu0 %v412
        %v638 = vpop.f32.mrf.mxu0
        %v639 = vadd.f32 %v446, %v638
        %v640 = vpop.f32.mrf.mxu0
        %v641 = vadd.f32 %v446, %v640
        %642 = vdwg.mxu0
        %643 = vmatpush.bf16.msra.mxu0 %v579
        %644 = vmatpush.bf16.msra.mxu0 %v575
        %645 = vmatpush.bf16.msra.mxu0 %v571
        %646 = vmatpush.bf16.msra.mxu0 %v567
        %647 = vmatpush.bf16.msra.mxu0 %v563
        %648 = vmatpush.bf16.msra.mxu0 %v559
        %649 = vmatpush.bf16.msra.mxu0 %v555
        %650 = vmatpush.bf16.msra.mxu0 %v551
        %651 = vmatmul.bf16.gmra.mxu0 %v409
        %v652 = vpop.f32.mrf.mxu0
        %v653 = vadd.f32 %v447, %v652
        %v654 = vpop.f32.mrf.mxu0
        %v655 = vadd.f32 %v447, %v654
        %656 = vmatmul.bf16.gmra.mxu0 %v410
        %v657 = vpop.f32.mrf.mxu0
        %v658 = vadd.f32 %v447, %v657
        %v659 = vpop.f32.mrf.mxu0
        %v660 = vadd.f32 %v447, %v659
        %661 = vmatmul.bf16.gmra.mxu0 %v411
        %v662 = vpop.f32.mrf.mxu0
        %v663 = vadd.f32 %v447, %v662
        %v664 = vpop.f32.mrf.mxu0
        %v665 = vadd.f32 %v447, %v664
        %666 = vmatmul.bf16.gmra.mxu0 %v412
        %v667 = vpop.f32.mrf.mxu0
        %v668 = vadd.f32 %v447, %v667
        %v669 = vpop.f32.mrf.mxu0
        %v670 = vadd.f32 %v447, %v669
        %671 = vdwg.mxu0
        %672 = vmatpush.bf16.msra.mxu0 %v580
        %673 = vmatpush.bf16.msra.mxu0 %v576
        %674 = vmatpush.bf16.msra.mxu0 %v572
        %675 = vmatpush.bf16.msra.mxu0 %v568
        %676 = vmatpush.bf16.msra.mxu0 %v564
        %677 = vmatpush.bf16.msra.mxu0 %v560
        %678 = vmatpush.bf16.msra.mxu0 %v556
        %679 = vmatpush.bf16.msra.mxu0 %v552
        %680 = vmatmul.bf16.gmra.mxu0 %v409
        %v681 = vpop.f32.mrf.mxu0
        %v682 = vadd.f32 %v448, %v681
        %v683 = vpop.f32.mrf.mxu0
        %v684 = vadd.f32 %v448, %v683
        %685 = vmatmul.bf16.gmra.mxu0 %v410
        %v686 = vpop.f32.mrf.mxu0
        %v687 = vadd.f32 %v448, %v686
        %v688 = vpop.f32.mrf.mxu0
        %v689 = vadd.f32 %v448, %v688
        %690 = vmatmul.bf16.gmra.mxu0 %v411
        %v691 = vpop.f32.mrf.mxu0
        %v692 = vadd.f32 %v448, %v691
        %v693 = vpop.f32.mrf.mxu0
        %v694 = vadd.f32 %v448, %v693
        %695 = vmatmul.bf16.gmra.mxu0 %v412
        %v696 = vpop.f32.mrf.mxu0
        %v697 = vadd.f32 %v448, %v696
        %v698 = vpop.f32.mrf.mxu0
        %v699 = vadd.f32 %v448, %v698
        %700 = vdwg.mxu0
        %701 = vmatpush.bf16.msra.mxu0 %v581
        %702 = vmatpush.bf16.msra.mxu0 %v577
        %703 = vmatpush.bf16.msra.mxu0 %v573
        %704 = vmatpush.bf16.msra.mxu0 %v569
        %705 = vmatpush.bf16.msra.mxu0 %v565
        %706 = vmatpush.bf16.msra.mxu0 %v561
        %707 = vmatpush.bf16.msra.mxu0 %v557
        %708 = vmatpush.bf16.msra.mxu0 %v553
        %709 = vmatmul.bf16.gmra.mxu0 %v409
        %v710 = vpop.f32.mrf.mxu0
        %v711 = vadd.f32 %v449, %v710
        %v712 = vpop.f32.mrf.mxu0
        %v713 = vadd.f32 %v449, %v712
        %714 = vmatmul.bf16.gmra.mxu0 %v410
        %v715 = vpop.f32.mrf.mxu0
        %v716 = vadd.f32 %v449, %v715
        %v717 = vpop.f32.mrf.mxu0
        %v718 = vadd.f32 %v449, %v717
        %719 = vmatmul.bf16.gmra.mxu0 %v411
        %v720 = vpop.f32.mrf.mxu0
        %v721 = vadd.f32 %v449, %v720
        %v722 = vpop.f32.mrf.mxu0
        %v723 = vadd.f32 %v449, %v722
        %724 = vmatmul.bf16.gmra.mxu0 %v412
        %v725 = vpop.f32.mrf.mxu0
        %v726 = vadd.f32 %v449, %v725
        %v727 = vpop.f32.mrf.mxu0
        %v728 = vadd.f32 %v449, %v727
        %729 = vdwg.mxu0
        %730 = vst [vmem:[#allocation2] sm:$0xff] %v624
        %731 = vst [vmem:[#allocation2 + $0x8] sm:$0xff] %v653
        %732 = vst [vmem:[#allocation2 + $0x10] sm:$0xff] %v682
        %733 = vst [vmem:[#allocation2 + $0x18] sm:$0xff] %v711
        %734 = vst [vmem:[#allocation2 + $0x20] sm:$0xff] %v626
        %735 = vst [vmem:[#allocation2 + $0x28] sm:$0xff] %v655
        %736 = vst [vmem:[#allocation2 + $0x30] sm:$0xff] %v684
        %737 = vst [vmem:[#allocation2 + $0x38] sm:$0xff] %v713
        %738 = vst [vmem:[#allocation2 + $0x40] sm:$0xff] %v629
        %739 = vst [vmem:[#allocation2 + $0x48] sm:$0xff] %v658
        %740 = vst [vmem:[#allocation2 + $0x50] sm:$0xff] %v687
        %741 = vst [vmem:[#allocation2 + $0x58] sm:$0xff] %v716
        %742 = vst [vmem:[#allocation2 + $0x60] sm:$0xff] %v631
        %743 = vst [vmem:[#allocation2 + $0x68] sm:$0xff] %v660
        %744 = vst [vmem:[#allocation2 + $0x70] sm:$0xff] %v689
        %745 = vst [vmem:[#allocation2 + $0x78] sm:$0xff] %v718
        %746 = vst [vmem:[#allocation2 + $0x80] sm:$0xff] %v634
        %747 = vst [vmem:[#allocation2 + $0x88] sm:$0xff] %v663
        %748 = vst [vmem:[#allocation2 + $0x90] sm:$0xff] %v692
        %749 = vst [vmem:[#allocation2 + $0x98] sm:$0xff] %v721
        %750 = vst [vmem:[#allocation2 + $0xa0] sm:$0xff] %v636
        %751 = vst [vmem:[#allocation2 + $0xa8] sm:$0xff] %v665
        %752 = vst [vmem:[#allocation2 + $0xb0] sm:$0xff] %v694
        %753 = vst [vmem:[#allocation2 + $0xb8] sm:$0xff] %v723
        %754 = vst [vmem:[#allocation2 + $0xc0] sm:$0xff] %v639
        %755 = vst [vmem:[#allocation2 + $0xc8] sm:$0xff] %v668
        %756 = vst [vmem:[#allocation2 + $0xd0] sm:$0xff] %v697
        %757 = vst [vmem:[#allocation2 + $0xd8] sm:$0xff] %v726
        %758 = vst [vmem:[#allocation2 + $0xe0] sm:$0xff] %v641
        %759 = vst [vmem:[#allocation2 + $0xe8] sm:$0xff] %v670
        %760 = vst [vmem:[#allocation2 + $0xf0] sm:$0xff] %v699
        %761 = vst [vmem:[#allocation2 + $0xf8] sm:$0xff] %v728
        %v762 = vld [vmem:[#allocation2] sm:$0xff]
        %v763 = vld [vmem:[#allocation2 + $0x8] sm:$0xff]
        %v764 = vld [vmem:[#allocation2 + $0x10] sm:$0xff]
        %v765 = vld [vmem:[#allocation2 + $0x18] sm:$0xff]
        %v766 = vld [vmem:[#allocation6 + $0x100] sm:$0xff]
        %v767 = vld [vmem:[#allocation6 + $0x108] sm:$0xff]
        %v768 = vld [vmem:[#allocation6 + $0x110] sm:$0xff]
        %v769 = vld [vmem:[#allocation6 + $0x118] sm:$0xff]
        %v770 = vld [vmem:[#allocation6 + $0x120] sm:$0xff]
        %v771 = vld [vmem:[#allocation6 + $0x128] sm:$0xff]
        %v772 = vld [vmem:[#allocation6 + $0x130] sm:$0xff]
        %v773 = vld [vmem:[#allocation6 + $0x138] sm:$0xff]
        %v774 = vld [vmem:[#allocation6 + $0x140] sm:$0xff]
        %v775 = vld [vmem:[#allocation6 + $0x148] sm:$0xff]
        %v776 = vld [vmem:[#allocation6 + $0x150] sm:$0xff]
        %v777 = vld [vmem:[#allocation6 + $0x158] sm:$0xff]
        %v778 = vld [vmem:[#allocation6 + $0x160] sm:$0xff]
        %v779 = vld [vmem:[#allocation6 + $0x168] sm:$0xff]
        %v780 = vld [vmem:[#allocation6 + $0x170] sm:$0xff]
        %v781 = vld [vmem:[#allocation6 + $0x178] sm:$0xff]
        %v782 = vld [vmem:[#allocation6 + $0x180] sm:$0xff]
        %v783 = vld [vmem:[#allocation6 + $0x188] sm:$0xff]
        %v784 = vld [vmem:[#allocation6 + $0x190] sm:$0xff]
        %v785 = vld [vmem:[#allocation6 + $0x198] sm:$0xff]
        %v786 = vld [vmem:[#allocation6 + $0x1a0] sm:$0xff]
        %v787 = vld [vmem:[#allocation6 + $0x1a8] sm:$0xff]
        %v788 = vld [vmem:[#allocation6 + $0x1b0] sm:$0xff]
        %v789 = vld [vmem:[#allocation6 + $0x1b8] sm:$0xff]
        %v790 = vld [vmem:[#allocation6 + $0x1c0] sm:$0xff]
        %v791 = vld [vmem:[#allocation6 + $0x1c8] sm:$0xff]
        %v792 = vld [vmem:[#allocation6 + $0x1d0] sm:$0xff]
        %v793 = vld [vmem:[#allocation6 + $0x1d8] sm:$0xff]
        %v794 = vld [vmem:[#allocation6 + $0x1e0] sm:$0xff]
        %v795 = vld [vmem:[#allocation6 + $0x1e8] sm:$0xff]
        %v796 = vld [vmem:[#allocation6 + $0x1f0] sm:$0xff]
        %v797 = vld [vmem:[#allocation6 + $0x1f8] sm:$0xff]
        %v830 = vunpack.c.l.b16 %v766
        %v831 = vunpack.c.h.b16 %v766
        %v832 = vunpack.c.l.b16 %v767
        %v833 = vunpack.c.h.b16 %v767
        %v834 = vunpack.c.l.b16 %v768
        %v835 = vunpack.c.h.b16 %v768
        %v836 = vunpack.c.l.b16 %v769
        %v837 = vunpack.c.h.b16 %v769
        %v838 = vunpack.c.l.b16 %v770
        %v839 = vunpack.c.h.b16 %v770
        %v840 = vunpack.c.l.b16 %v771
        %v841 = vunpack.c.h.b16 %v771
        %v842 = vunpack.c.l.b16 %v772
        %v843 = vunpack.c.h.b16 %v772
        %v844 = vunpack.c.l.b16 %v773
        %v845 = vunpack.c.h.b16 %v773
        %v846 = vunpack.c.l.b16 %v774
        %v847 = vunpack.c.h.b16 %v774
        %v848 = vunpack.c.l.b16 %v775
        %v849 = vunpack.c.h.b16 %v775
        %v850 = vunpack.c.l.b16 %v776
        %v851 = vunpack.c.h.b16 %v776
        %v852 = vunpack.c.l.b16 %v777
        %v853 = vunpack.c.h.b16 %v777
        %v854 = vunpack.c.l.b16 %v778
        %v855 = vunpack.c.h.b16 %v778
        %v856 = vunpack.c.l.b16 %v779
        %v857 = vunpack.c.h.b16 %v779
        %v858 = vunpack.c.l.b16 %v780
        %v859 = vunpack.c.h.b16 %v780
        %v860 = vunpack.c.l.b16 %v781
        %v861 = vunpack.c.h.b16 %v781
        %v862 = vunpack.c.l.b16 %v782
        %v863 = vunpack.c.h.b16 %v782
        %v864 = vunpack.c.l.b16 %v783
        %v865 = vunpack.c.h.b16 %v783
        %v866 = vunpack.c.l.b16 %v784
        %v867 = vunpack.c.h.b16 %v784
        %v868 = vunpack.c.l.b16 %v785
        %v869 = vunpack.c.h.b16 %v785
        %v870 = vunpack.c.l.b16 %v786
        %v871 = vunpack.c.h.b16 %v786
        %v872 = vunpack.c.l.b16 %v787
        %v873 = vunpack.c.h.b16 %v787
        %v874 = vunpack.c.l.b16 %v788
        %v875 = vunpack.c.h.b16 %v788
        %v876 = vunpack.c.l.b16 %v789
        %v877 = vunpack.c.h.b16 %v789
        %v878 = vunpack.c.l.b16 %v790
        %v879 = vunpack.c.h.b16 %v790
        %v880 = vunpack.c.l.b16 %v791
        %v881 = vunpack.c.h.b16 %v791
        %v882 = vunpack.c.l.b16 %v792
        %v883 = vunpack.c.h.b16 %v792
        %v884 = vunpack.c.l.b16 %v793
        %v885 = vunpack.c.h.b16 %v793
        %v886 = vunpack.c.l.b16 %v794
        %v887 = vunpack.c.h.b16 %v794
        %v888 = vunpack.c.l.b16 %v795
        %v889 = vunpack.c.h.b16 %v795
        %v890 = vunpack.c.l.b16 %v796
        %v891 = vunpack.c.h.b16 %v796
        %v892 = vunpack.c.l.b16 %v797
        %v893 = vunpack.c.h.b16 %v797
        %v894 = vpack.c.b16 %v834, %v830
        %v895 = vpack.c.b16 %v835, %v831
        %v896 = vpack.c.b16 %v836, %v832
        %v897 = vpack.c.b16 %v837, %v833
        %v898 = vpack.c.b16 %v842, %v838
        %v899 = vpack.c.b16 %v843, %v839
        %v900 = vpack.c.b16 %v844, %v840
        %v901 = vpack.c.b16 %v845, %v841
        %v902 = vpack.c.b16 %v850, %v846
        %v903 = vpack.c.b16 %v851, %v847
        %v904 = vpack.c.b16 %v852, %v848
        %v905 = vpack.c.b16 %v853, %v849
        %v906 = vpack.c.b16 %v858, %v854
        %v907 = vpack.c.b16 %v859, %v855
        %v908 = vpack.c.b16 %v860, %v856
        %v909 = vpack.c.b16 %v861, %v857
        %v910 = vpack.c.b16 %v866, %v862
        %v911 = vpack.c.b16 %v867, %v863
        %v912 = vpack.c.b16 %v868, %v864
        %v913 = vpack.c.b16 %v869, %v865
        %v914 = vpack.c.b16 %v874, %v870
        %v915 = vpack.c.b16 %v875, %v871
        %v916 = vpack.c.b16 %v876, %v872
        %v917 = vpack.c.b16 %v877, %v873
        %v918 = vpack.c.b16 %v882, %v878
        %v919 = vpack.c.b16 %v883, %v879
        %v920 = vpack.c.b16 %v884, %v880
        %v921 = vpack.c.b16 %v885, %v881
        %v922 = vpack.c.b16 %v890, %v886
        %v923 = vpack.c.b16 %v891, %v887
        %v924 = vpack.c.b16 %v892, %v888
        %v925 = vpack.c.b16 %v893, %v889
        %958 = vmatpush.bf16.msra.mxu0 %v922
        %959 = vmatpush.bf16.msra.mxu0 %v918
        %960 = vmatpush.bf16.msra.mxu0 %v914
        %961 = vmatpush.bf16.msra.mxu0 %v910
        %962 = vmatpush.bf16.msra.mxu0 %v906
        %963 = vmatpush.bf16.msra.mxu0 %v902
        %964 = vmatpush.bf16.msra.mxu0 %v898
        %965 = vmatpush.bf16.msra.mxu0 %v894
        %966 = vmatmul.bf16.gmra.mxu0 0
        %v967 = vpop.f32.mrf.mxu0
        %v968 = vadd.f32 0.0, %v967
        %v969 = vpop.f32.mrf.mxu0
        %970 = vdwg.mxu0
        %971 = vmatpush.bf16.msra.mxu0 %v923
        %972 = vmatpush.bf16.msra.mxu0 %v919
        %973 = vmatpush.bf16.msra.mxu0 %v915
        %974 = vmatpush.bf16.msra.mxu0 %v911
        %975 = vmatpush.bf16.msra.mxu0 %v907
        %976 = vmatpush.bf16.msra.mxu0 %v903
        %977 = vmatpush.bf16.msra.mxu0 %v899
        %978 = vmatpush.bf16.msra.mxu0 %v895
        %979 = vmatmul.bf16.gmra.mxu0 0
        %v980 = vpop.f32.mrf.mxu0
        %v981 = vadd.f32 0.0, %v980
        %v982 = vpop.f32.mrf.mxu0
        %983 = vdwg.mxu0
        %984 = vmatpush.bf16.msra.mxu0 %v924
        %985 = vmatpush.bf16.msra.mxu0 %v920
        %986 = vmatpush.bf16.msra.mxu0 %v916
        %987 = vmatpush.bf16.msra.mxu0 %v912
        %988 = vmatpush.bf16.msra.mxu0 %v908
        %989 = vmatpush.bf16.msra.mxu0 %v904
        %990 = vmatpush.bf16.msra.mxu0 %v900
        %991 = vmatpush.bf16.msra.mxu0 %v896
        %992 = vmatmul.bf16.gmra.mxu0 0
        %v993 = vpop.f32.mrf.mxu0
        %v994 = vadd.f32 0.0, %v993
        %v995 = vpop.f32.mrf.mxu0
        %996 = vdwg.mxu0
        %997 = vmatpush.bf16.msra.mxu0 %v925
        %998 = vmatpush.bf16.msra.mxu0 %v921
        %999 = vmatpush.bf16.msra.mxu0 %v917
        %1000 = vmatpush.bf16.msra.mxu0 %v913
        %1001 = vmatpush.bf16.msra.mxu0 %v909
        %1002 = vmatpush.bf16.msra.mxu0 %v905
        %1003 = vmatpush.bf16.msra.mxu0 %v901
        %1004 = vmatpush.bf16.msra.mxu0 %v897
        %1005 = vmatmul.bf16.gmra.mxu0 0
        %v1006 = vpop.f32.mrf.mxu0
        %v1007 = vadd.f32 0.0, %v1006
        %v1008 = vpop.f32.mrf.mxu0
        %1009 = vdwg.mxu0
        %v1010 = vadd.f32 %v762, %v968
        %v1011 = vadd.f32 %v763, %v981
        %v1012 = vadd.f32 %v764, %v994
        %v1013 = vadd.f32 %v765, %v1007
        %v1014 = vsub.f32 0.0, %v1010
        %v1015 = vmul.f32 %v1014, 1.442695
        %v1016 = vpow.pop %v1015
        %v1017 = vadd.f32 %v1016, 1.0
        %v1018 = vrcp.pop %v1017
        %v1019 = vmul.f32 %v1017, %v1018
        %v1020 = vsub.f32 1.0, %v1019
        %v1021 = vmul.f32 %v1018, %v1020
        %v1022 = vadd.f32 %v1018, %v1021
        %vm1023 = vweird.f32 %v1017
        %vm1024 = vweird.f32 %v1018
        %vm1025 = vmor %vm1023, %vm1024
        %v1026 = vsel %vm1025, %v1018, %v1022
        %v1027 = vand.u32 2147483647, %v1017
        %vm1028 = vcmp.eq.f32.partialorder %v1027, 8.507059e+37
        %v1029 = vand.u32 %v1017, 2147483648
        %v1030 = vor.u32 1.1754944e-38, %v1029
        %v1031 = vsel %vm1028, %v1030, %v1026
        %v1032 = vmul.f32 1.0, %v1031
        %v1033 = vsub.f32 0.0, %v1011
        %v1034 = vmul.f32 %v1033, 1.442695
        %v1035 = vpow.pop %v1034
        %v1036 = vadd.f32 %v1035, 1.0
        %v1037 = vrcp.pop %v1036
        %v1038 = vmul.f32 %v1036, %v1037
        %v1039 = vsub.f32 1.0, %v1038
        %v1040 = vmul.f32 %v1037, %v1039
        %v1041 = vadd.f32 %v1037, %v1040
        %vm1042 = vweird.f32 %v1036
        %vm1043 = vweird.f32 %v1037
        %vm1044 = vmor %vm1042, %vm1043
        %v1045 = vsel %vm1044, %v1037, %v1041
        %v1046 = vand.u32 2147483647, %v1036
        %vm1047 = vcmp.eq.f32.partialorder %v1046, 8.507059e+37
        %v1048 = vand.u32 %v1036, 2147483648
        %v1049 = vor.u32 1.1754944e-38, %v1048
        %v1050 = vsel %vm1047, %v1049, %v1045
        %v1051 = vmul.f32 1.0, %v1050
        %v1052 = vtanh.pop %v1012
        %v1053 = vsub.f32 0.0, %v1013
        %v1054 = vmul.f32 %v1053, 1.442695
        %v1055 = vpow.pop %v1054
        %v1056 = vadd.f32 %v1055, 1.0
        %v1057 = vrcp.pop %v1056
        %v1058 = vmul.f32 %v1056, %v1057
        %v1059 = vsub.f32 1.0, %v1058
        %v1060 = vmul.f32 %v1057, %v1059
        %v1061 = vadd.f32 %v1057, %v1060
        %vm1062 = vweird.f32 %v1056
        %vm1063 = vweird.f32 %v1057
        %vm1064 = vmor %vm1062, %vm1063
        %v1065 = vsel %vm1064, %v1057, %v1061
        %v1066 = vand.u32 2147483647, %v1056
        %vm1067 = vcmp.eq.f32.partialorder %v1066, 8.507059e+37
        %v1068 = vand.u32 %v1056, 2147483648
        %v1069 = vor.u32 1.1754944e-38, %v1068
        %v1070 = vsel %vm1067, %v1069, %v1065
        %v1071 = vmul.f32 1.0, %v1070
        %v1072 = vmul.f32 %v1051, 0.0
        %v1073 = vmul.f32 %v1032, %v1052
        %v1074 = vadd.f32 %v1072, %v1073
        %v1075 = vtanh.pop %v1074
        %v1076 = vmul.f32 %v1071, %v1075
        %s1077 = scalar_lea.vmem [#allocation2], 32
        %v1078 = vld [vmem:[%s1077] sm:$0xff]
        %v1079 = vld [vmem:[%s1077 + $0x8] sm:$0xff]
        %v1080 = vld [vmem:[%s1077 + $0x10] sm:$0xff]
        %v1081 = vld [vmem:[%s1077 + $0x18] sm:$0xff]
        %v1082 = vpack.c.bf16 %v1076, %v1076
        %1083 = vmatpush.bf16.msra.mxu0 %v922
        %1084 = vmatpush.bf16.msra.mxu0 %v918
        %1085 = vmatpush.bf16.msra.mxu0 %v914
        %1086 = vmatpush.bf16.msra.mxu0 %v910
        %1087 = vmatpush.bf16.msra.mxu0 %v906
        %1088 = vmatpush.bf16.msra.mxu0 %v902
        %1089 = vmatpush.bf16.msra.mxu0 %v898
        %1090 = vmatpush.bf16.msra.mxu0 %v894
        %1091 = vmatmul.bf16.gmra.mxu0 %v1082
        %v1092 = vpop.f32.mrf.mxu0
        %v1093 = vadd.f32 0.0, %v1092
        %v1094 = vpop.f32.mrf.mxu0
        %1095 = vdwg.mxu0
        %1096 = vmatpush.bf16.msra.mxu0 %v923
        %1097 = vmatpush.bf16.msra.mxu0 %v919
        %1098 = vmatpush.bf16.msra.mxu0 %v915
        %1099 = vmatpush.bf16.msra.mxu0 %v911
        %1100 = vmatpush.bf16.msra.mxu0 %v907
        %1101 = vmatpush.bf16.msra.mxu0 %v903
        %1102 = vmatpush.bf16.msra.mxu0 %v899
        %1103 = vmatpush.bf16.msra.mxu0 %v895
        %1104 = vmatmul.bf16.gmra.mxu0 %v1082
        %v1105 = vpop.f32.mrf.mxu0
        %v1106 = vadd.f32 0.0, %v1105
        %v1107 = vpop.f32.mrf.mxu0
        %1108 = vdwg.mxu0
        %1109 = vmatpush.bf16.msra.mxu0 %v924
        %1110 = vmatpush.bf16.msra.mxu0 %v920
        %1111 = vmatpush.bf16.msra.mxu0 %v916
        %1112 = vmatpush.bf16.msra.mxu0 %v912
        %1113 = vmatpush.bf16.msra.mxu0 %v908
        %1114 = vmatpush.bf16.msra.mxu0 %v904
        %1115 = vmatpush.bf16.msra.mxu0 %v900
        %1116 = vmatpush.bf16.msra.mxu0 %v896
        %1117 = vmatmul.bf16.gmra.mxu0 %v1082
        %v1118 = vpop.f32.mrf.mxu0
        %v1119 = vadd.f32 0.0, %v1118
        %v1120 = vpop.f32.mrf.mxu0
        %1121 = vdwg.mxu0
        %1122 = vmatpush.bf16.msra.mxu0 %v925
        %1123 = vmatpush.bf16.msra.mxu0 %v921
        %1124 = vmatpush.bf16.msra.mxu0 %v917
        %1125 = vmatpush.bf16.msra.mxu0 %v913
        %1126 = vmatpush.bf16.msra.mxu0 %v909
        %1127 = vmatpush.bf16.msra.mxu0 %v905
        %1128 = vmatpush.bf16.msra.mxu0 %v901
        %1129 = vmatpush.bf16.msra.mxu0 %v897
        %1130 = vmatmul.bf16.gmra.mxu0 %v1082
        %v1131 = vpop.f32.mrf.mxu0
        %v1132 = vadd.f32 0.0, %v1131
        %v1133 = vpop.f32.mrf.mxu0
        %1134 = vdwg.mxu0
        %v1135 = vadd.f32 %v1078, %v1093
        %v1136 = vadd.f32 %v1079, %v1106
        %v1137 = vadd.f32 %v1080, %v1119
        %v1138 = vadd.f32 %v1081, %v1132
        %v1139 = vsub.f32 0.0, %v1135
        %v1140 = vmul.f32 %v1139, 1.442695
        %v1141 = vpow.pop %v1140
        %v1142 = vadd.f32 %v1141, 1.0
        %v1143 = vrcp.pop %v1142
        %v1144 = vmul.f32 %v1142, %v1143
        %v1145 = vsub.f32 1.0, %v1144
        %v1146 = vmul.f32 %v1143, %v1145
        %v1147 = vadd.f32 %v1143, %v1146
        %vm1148 = vweird.f32 %v1142
        %vm1149 = vweird.f32 %v1143
        %vm1150 = vmor %vm1148, %vm1149
        %v1151 = vsel %vm1150, %v1143, %v1147
        %v1152 = vand.u32 2147483647, %v1142
        %vm1153 = vcmp.eq.f32.partialorder %v1152, 8.507059e+37
        %v1154 = vand.u32 %v1142, 2147483648
        %v1155 = vor.u32 1.1754944e-38, %v1154
        %v1156 = vsel %vm1153, %v1155, %v1151
        %v1157 = vmul.f32 1.0, %v1156
        %v1158 = vsub.f32 0.0, %v1136
        %v1159 = vmul.f32 %v1158, 1.442695
        %v1160 = vpow.pop %v1159
        %v1161 = vadd.f32 %v1160, 1.0
        %v1162 = vrcp.pop %v1161
        %v1163 = vmul.f32 %v1161, %v1162
        %v1164 = vsub.f32 1.0, %v1163
        %v1165 = vmul.f32 %v1162, %v1164
        %v1166 = vadd.f32 %v1162, %v1165
        %vm1167 = vweird.f32 %v1161
        %vm1168 = vweird.f32 %v1162
        %vm1169 = vmor %vm1167, %vm1168
        %v1170 = vsel %vm1169, %v1162, %v1166
        %v1171 = vand.u32 2147483647, %v1161
        %vm1172 = vcmp.eq.f32.partialorder %v1171, 8.507059e+37
        %v1173 = vand.u32 %v1161, 2147483648
        %v1174 = vor.u32 1.1754944e-38, %v1173
        %v1175 = vsel %vm1172, %v1174, %v1170
        %v1176 = vmul.f32 1.0, %v1175
        %v1177 = vtanh.pop %v1137
        %v1178 = vsub.f32 0.0, %v1138
        %v1179 = vmul.f32 %v1178, 1.442695
        %v1180 = vpow.pop %v1179
        %v1181 = vadd.f32 %v1180, 1.0
        %v1182 = vrcp.pop %v1181
        %v1183 = vmul.f32 %v1181, %v1182
        %v1184 = vsub.f32 1.0, %v1183
        %v1185 = vmul.f32 %v1182, %v1184
        %v1186 = vadd.f32 %v1182, %v1185
        %vm1187 = vweird.f32 %v1181
        %vm1188 = vweird.f32 %v1182
        %vm1189 = vmor %vm1187, %vm1188
        %v1190 = vsel %vm1189, %v1182, %v1186
        %v1191 = vand.u32 2147483647, %v1181
        %vm1192 = vcmp.eq.f32.partialorder %v1191, 8.507059e+37
        %v1193 = vand.u32 %v1181, 2147483648
        %v1194 = vor.u32 1.1754944e-38, %v1193
        %v1195 = vsel %vm1192, %v1194, %v1190
        %v1196 = vmul.f32 1.0, %v1195
        %v1197 = vmul.f32 %v1176, %v1074
        %v1198 = vmul.f32 %v1157, %v1177
        %v1199 = vadd.f32 %v1197, %v1198
        %v1200 = vtanh.pop %v1199
        %v1201 = vmul.f32 %v1196, %v1200
        %s1202 = scalar_lea.vmem [#allocation2], 64
        %v1203 = vld [vmem:[%s1202] sm:$0xff]
        %v1204 = vld [vmem:[%s1202 + $0x8] sm:$0xff]
        %v1205 = vld [vmem:[%s1202 + $0x10] sm:$0xff]
        %v1206 = vld [vmem:[%s1202 + $0x18] sm:$0xff]
        %v1207 = vpack.c.bf16 %v1201, %v1201
        %1208 = vmatpush.bf16.msra.mxu0 %v922
        %1209 = vmatpush.bf16.msra.mxu0 %v918
        %1210 = vmatpush.bf16.msra.mxu0 %v914
        %1211 = vmatpush.bf16.msra.mxu0 %v910
        %1212 = vmatpush.bf16.msra.mxu0 %v906
        %1213 = vmatpush.bf16.msra.mxu0 %v902
        %1214 = vmatpush.bf16.msra.mxu0 %v898
        %1215 = vmatpush.bf16.msra.mxu0 %v894
        %1216 = vmatmul.bf16.gmra.mxu0 %v1207
        %v1217 = vpop.f32.mrf.mxu0
        %v1218 = vadd.f32 0.0, %v1217
        %v1219 = vpop.f32.mrf.mxu0
        %1220 = vdwg.mxu0
        %1221 = vmatpush.bf16.msra.mxu0 %v923
        %1222 = vmatpush.bf16.msra.mxu0 %v919
        %1223 = vmatpush.bf16.msra.mxu0 %v915
        %1224 = vmatpush.bf16.msra.mxu0 %v911
        %1225 = vmatpush.bf16.msra.mxu0 %v907
        %1226 = vmatpush.bf16.msra.mxu0 %v903
        %1227 = vmatpush.bf16.msra.mxu0 %v899
        %1228 = vmatpush.bf16.msra.mxu0 %v895
        %1229 = vmatmul.bf16.gmra.mxu0 %v1207
        %v1230 = vpop.f32.mrf.mxu0
        %v1231 = vadd.f32 0.0, %v1230
        %v1232 = vpop.f32.mrf.mxu0
        %1233 = vdwg.mxu0
        %1234 = vmatpush.bf16.msra.mxu0 %v924
        %1235 = vmatpush.bf16.msra.mxu0 %v920
        %1236 = vmatpush.bf16.msra.mxu0 %v916
        %1237 = vmatpush.bf16.msra.mxu0 %v912
        %1238 = vmatpush.bf16.msra.mxu0 %v908
        %1239 = vmatpush.bf16.msra.mxu0 %v904
        %1240 = vmatpush.bf16.msra.mxu0 %v900
        %1241 = vmatpush.bf16.msra.mxu0 %v896
        %1242 = vmatmul.bf16.gmra.mxu0 %v1207
        %v1243 = vpop.f32.mrf.mxu0
        %v1244 = vadd.f32 0.0, %v1243
        %v1245 = vpop.f32.mrf.mxu0
        %1246 = vdwg.mxu0
        %1247 = vmatpush.bf16.msra.mxu0 %v925
        %1248 = vmatpush.bf16.msra.mxu0 %v921
        %1249 = vmatpush.bf16.msra.mxu0 %v917
        %1250 = vmatpush.bf16.msra.mxu0 %v913
        %1251 = vmatpush.bf16.msra.mxu0 %v909
        %1252 = vmatpush.bf16.msra.mxu0 %v905
        %1253 = vmatpush.bf16.msra.mxu0 %v901
        %1254 = vmatpush.bf16.msra.mxu0 %v897
        %1255 = vmatmul.bf16.gmra.mxu0 %v1207
        %v1256 = vpop.f32.mrf.mxu0
        %v1257 = vadd.f32 0.0, %v1256
        %v1258 = vpop.f32.mrf.mxu0
        %1259 = vdwg.mxu0
        %v1260 = vadd.f32 %v1203, %v1218
        %v1261 = vadd.f32 %v1204, %v1231
        %v1262 = vadd.f32 %v1205, %v1244
        %v1263 = vadd.f32 %v1206, %v1257
        %v1264 = vsub.f32 0.0, %v1260
        %v1265 = vmul.f32 %v1264, 1.442695
        %v1266 = vpow.pop %v1265
        %v1267 = vadd.f32 %v1266, 1.0
        %v1268 = vrcp.pop %v1267
        %v1269 = vmul.f32 %v1267, %v1268
        %v1270 = vsub.f32 1.0, %v1269
        %v1271 = vmul.f32 %v1268, %v1270
        %v1272 = vadd.f32 %v1268, %v1271
        %vm1273 = vweird.f32 %v1267
        %vm1274 = vweird.f32 %v1268
        %vm1275 = vmor %vm1273, %vm1274
        %v1276 = vsel %vm1275, %v1268, %v1272
        %v1277 = vand.u32 2147483647, %v1267
        %vm1278 = vcmp.eq.f32.partialorder %v1277, 8.507059e+37
        %v1279 = vand.u32 %v1267, 2147483648
        %v1280 = vor.u32 1.1754944e-38, %v1279
        %v1281 = vsel %vm1278, %v1280, %v1276
        %v1282 = vmul.f32 1.0, %v1281
        %v1283 = vsub.f32 0.0, %v1261
        %v1284 = vmul.f32 %v1283, 1.442695
        %v1285 = vpow.pop %v1284
        %v1286 = vadd.f32 %v1285, 1.0
        %v1287 = vrcp.pop %v1286
        %v1288 = vmul.f32 %v1286, %v1287
        %v1289 = vsub.f32 1.0, %v1288
        %v1290 = vmul.f32 %v1287, %v1289
        %v1291 = vadd.f32 %v1287, %v1290
        %vm1292 = vweird.f32 %v1286
        %vm1293 = vweird.f32 %v1287
        %vm1294 = vmor %vm1292, %vm1293
        %v1295 = vsel %vm1294, %v1287, %v1291
        %v1296 = vand.u32 2147483647, %v1286
        %vm1297 = vcmp.eq.f32.partialorder %v1296, 8.507059e+37
        %v1298 = vand.u32 %v1286, 2147483648
        %v1299 = vor.u32 1.1754944e-38, %v1298
        %v1300 = vsel %vm1297, %v1299, %v1295
        %v1301 = vmul.f32 1.0, %v1300
        %v1302 = vtanh.pop %v1262
        %v1303 = vsub.f32 0.0, %v1263
        %v1304 = vmul.f32 %v1303, 1.442695
        %v1305 = vpow.pop %v1304
        %v1306 = vadd.f32 %v1305, 1.0
        %v1307 = vrcp.pop %v1306
        %v1308 = vmul.f32 %v1306, %v1307
        %v1309 = vsub.f32 1.0, %v1308
        %v1310 = vmul.f32 %v1307, %v1309
        %v1311 = vadd.f32 %v1307, %v1310
        %vm1312 = vweird.f32 %v1306
        %vm1313 = vweird.f32 %v1307
        %vm1314 = vmor %vm1312, %vm1313
        %v1315 = vsel %vm1314, %v1307, %v1311
        %v1316 = vand.u32 2147483647, %v1306
        %vm1317 = vcmp.eq.f32.partialorder %v1316, 8.507059e+37
        %v1318 = vand.u32 %v1306, 2147483648
        %v1319 = vor.u32 1.1754944e-38, %v1318
        %v1320 = vsel %vm1317, %v1319, %v1315
        %v1321 = vmul.f32 1.0, %v1320
        %v1322 = vmul.f32 %v1301, %v1199
        %v1323 = vmul.f32 %v1282, %v1302
        %v1324 = vadd.f32 %v1322, %v1323
        %v1325 = vtanh.pop %v1324
        %v1326 = vmul.f32 %v1321, %v1325
        %s1327 = scalar_lea.vmem [#allocation2], 96
        %v1328 = vld [vmem:[%s1327] sm:$0xff]
        %v1329 = vld [vmem:[%s1327 + $0x8] sm:$0xff]
        %v1330 = vld [vmem:[%s1327 + $0x10] sm:$0xff]
        %v1331 = vld [vmem:[%s1327 + $0x18] sm:$0xff]
        %v1332 = vpack.c.bf16 %v1326, %v1326
        %1333 = vmatpush.bf16.msra.mxu0 %v922
        %1334 = vmatpush.bf16.msra.mxu0 %v918
        %1335 = vmatpush.bf16.msra.mxu0 %v914
        %1336 = vmatpush.bf16.msra.mxu0 %v910
        %1337 = vmatpush.bf16.msra.mxu0 %v906
        %1338 = vmatpush.bf16.msra.mxu0 %v902
        %1339 = vmatpush.bf16.msra.mxu0 %v898
        %1340 = vmatpush.bf16.msra.mxu0 %v894
        %1341 = vmatmul.bf16.gmra.mxu0 %v1332
        %v1342 = vpop.f32.mrf.mxu0
        %v1343 = vadd.f32 0.0, %v1342
        %v1344 = vpop.f32.mrf.mxu0
        %1345 = vdwg.mxu0
        %1346 = vmatpush.bf16.msra.mxu0 %v923
        %1347 = vmatpush.bf16.msra.mxu0 %v919
        %1348 = vmatpush.bf16.msra.mxu0 %v915
        %1349 = vmatpush.bf16.msra.mxu0 %v911
        %1350 = vmatpush.bf16.msra.mxu0 %v907
        %1351 = vmatpush.bf16.msra.mxu0 %v903
        %1352 = vmatpush.bf16.msra.mxu0 %v899
        %1353 = vmatpush.bf16.msra.mxu0 %v895
        %1354 = vmatmul.bf16.gmra.mxu0 %v1332
        %v1355 = vpop.f32.mrf.mxu0
        %v1356 = vadd.f32 0.0, %v1355
        %v1357 = vpop.f32.mrf.mxu0
        %1358 = vdwg.mxu0
        %1359 = vmatpush.bf16.msra.mxu0 %v924
        %1360 = vmatpush.bf16.msra.mxu0 %v920
        %1361 = vmatpush.bf16.msra.mxu0 %v916
        %1362 = vmatpush.bf16.msra.mxu0 %v912
        %1363 = vmatpush.bf16.msra.mxu0 %v908
        %1364 = vmatpush.bf16.msra.mxu0 %v904
        %1365 = vmatpush.bf16.msra.mxu0 %v900
        %1366 = vmatpush.bf16.msra.mxu0 %v896
        %1367 = vmatmul.bf16.gmra.mxu0 %v1332
        %v1368 = vpop.f32.mrf.mxu0
        %v1369 = vadd.f32 0.0, %v1368
        %v1370 = vpop.f32.mrf.mxu0
        %1371 = vdwg.mxu0
        %1372 = vmatpush.bf16.msra.mxu0 %v925
        %1373 = vmatpush.bf16.msra.mxu0 %v921
        %1374 = vmatpush.bf16.msra.mxu0 %v917
        %1375 = vmatpush.bf16.msra.mxu0 %v913
        %1376 = vmatpush.bf16.msra.mxu0 %v909
        %1377 = vmatpush.bf16.msra.mxu0 %v905
        %1378 = vmatpush.bf16.msra.mxu0 %v901
        %1379 = vmatpush.bf16.msra.mxu0 %v897
        %1380 = vmatmul.bf16.gmra.mxu0 %v1332
        %v1381 = vpop.f32.mrf.mxu0
        %v1382 = vadd.f32 0.0, %v1381
        %v1383 = vpop.f32.mrf.mxu0
        %1384 = vdwg.mxu0
        %v1385 = vadd.f32 %v1328, %v1343
        %v1386 = vadd.f32 %v1329, %v1356
        %v1387 = vadd.f32 %v1330, %v1369
        %v1388 = vadd.f32 %v1331, %v1382
        %v1389 = vsub.f32 0.0, %v1385
        %v1390 = vmul.f32 %v1389, 1.442695
        %v1391 = vpow.pop %v1390
        %v1392 = vadd.f32 %v1391, 1.0
        %v1393 = vrcp.pop %v1392
        %v1394 = vmul.f32 %v1392, %v1393
        %v1395 = vsub.f32 1.0, %v1394
        %v1396 = vmul.f32 %v1393, %v1395
        %v1397 = vadd.f32 %v1393, %v1396
        %vm1398 = vweird.f32 %v1392
        %vm1399 = vweird.f32 %v1393
        %vm1400 = vmor %vm1398, %vm1399
        %v1401 = vsel %vm1400, %v1393, %v1397
        %v1402 = vand.u32 2147483647, %v1392
        %vm1403 = vcmp.eq.f32.partialorder %v1402, 8.507059e+37
        %v1404 = vand.u32 %v1392, 2147483648
        %v1405 = vor.u32 1.1754944e-38, %v1404
        %v1406 = vsel %vm1403, %v1405, %v1401
        %v1407 = vmul.f32 1.0, %v1406
        %v1408 = vsub.f32 0.0, %v1386
        %v1409 = vmul.f32 %v1408, 1.442695
        %v1410 = vpow.pop %v1409
        %v1411 = vadd.f32 %v1410, 1.0
        %v1412 = vrcp.pop %v1411
        %v1413 = vmul.f32 %v1411, %v1412
        %v1414 = vsub.f32 1.0, %v1413
        %v1415 = vmul.f32 %v1412, %v1414
        %v1416 = vadd.f32 %v1412, %v1415
        %vm1417 = vweird.f32 %v1411
        %vm1418 = vweird.f32 %v1412
        %vm1419 = vmor %vm1417, %vm1418
        %v1420 = vsel %vm1419, %v1412, %v1416
        %v1421 = vand.u32 2147483647, %v1411
        %vm1422 = vcmp.eq.f32.partialorder %v1421, 8.507059e+37
        %v1423 = vand.u32 %v1411, 2147483648
        %v1424 = vor.u32 1.1754944e-38, %v1423
        %v1425 = vsel %vm1422, %v1424, %v1420
        %v1426 = vmul.f32 1.0, %v1425
        %v1427 = vtanh.pop %v1387
        %v1428 = vsub.f32 0.0, %v1388
        %v1429 = vmul.f32 %v1428, 1.442695
        %v1430 = vpow.pop %v1429
        %v1431 = vadd.f32 %v1430, 1.0
        %v1432 = vrcp.pop %v1431
        %v1433 = vmul.f32 %v1431, %v1432
        %v1434 = vsub.f32 1.0, %v1433
        %v1435 = vmul.f32 %v1432, %v1434
        %v1436 = vadd.f32 %v1432, %v1435
        %vm1437 = vweird.f32 %v1431
        %vm1438 = vweird.f32 %v1432
        %vm1439 = vmor %vm1437, %vm1438
        %v1440 = vsel %vm1439, %v1432, %v1436
        %v1441 = vand.u32 2147483647, %v1431
        %vm1442 = vcmp.eq.f32.partialorder %v1441, 8.507059e+37
        %v1443 = vand.u32 %v1431, 2147483648
        %v1444 = vor.u32 1.1754944e-38, %v1443
        %v1445 = vsel %vm1442, %v1444, %v1440
        %v1446 = vmul.f32 1.0, %v1445
        %v1447 = vmul.f32 %v1426, %v1324
        %v1448 = vmul.f32 %v1407, %v1427
        %v1449 = vadd.f32 %v1447, %v1448
        %v1450 = vtanh.pop %v1449
        %v1451 = vmul.f32 %v1446, %v1450
        %s1452 = scalar_lea.vmem [#allocation2], 128
        %v1453 = vld [vmem:[%s1452] sm:$0xff]
        %v1454 = vld [vmem:[%s1452 + $0x8] sm:$0xff]
        %v1455 = vld [vmem:[%s1452 + $0x10] sm:$0xff]
        %v1456 = vld [vmem:[%s1452 + $0x18] sm:$0xff]
        %v1457 = vpack.c.bf16 %v1451, %v1451
        %1458 = vmatpush.bf16.msra.mxu0 %v922
        %1459 = vmatpush.bf16.msra.mxu0 %v918
        %1460 = vmatpush.bf16.msra.mxu0 %v914
        %1461 = vmatpush.bf16.msra.mxu0 %v910
        %1462 = vmatpush.bf16.msra.mxu0 %v906
        %1463 = vmatpush.bf16.msra.mxu0 %v902
        %1464 = vmatpush.bf16.msra.mxu0 %v898
        %1465 = vmatpush.bf16.msra.mxu0 %v894
        %1466 = vmatmul.bf16.gmra.mxu0 %v1457
        %v1467 = vpop.f32.mrf.mxu0
        %v1468 = vadd.f32 0.0, %v1467
        %v1469 = vpop.f32.mrf.mxu0
        %1470 = vdwg.mxu0
        %1471 = vmatpush.bf16.msra.mxu0 %v923
        %1472 = vmatpush.bf16.msra.mxu0 %v919
        %1473 = vmatpush.bf16.msra.mxu0 %v915
        %1474 = vmatpush.bf16.msra.mxu0 %v911
        %1475 = vmatpush.bf16.msra.mxu0 %v907
        %1476 = vmatpush.bf16.msra.mxu0 %v903
        %1477 = vmatpush.bf16.msra.mxu0 %v899
        %1478 = vmatpush.bf16.msra.mxu0 %v895
        %1479 = vmatmul.bf16.gmra.mxu0 %v1457
        %v1480 = vpop.f32.mrf.mxu0
        %v1481 = vadd.f32 0.0, %v1480
        %v1482 = vpop.f32.mrf.mxu0
        %1483 = vdwg.mxu0
        %1484 = vmatpush.bf16.msra.mxu0 %v924
        %1485 = vmatpush.bf16.msra.mxu0 %v920
        %1486 = vmatpush.bf16.msra.mxu0 %v916
        %1487 = vmatpush.bf16.msra.mxu0 %v912
        %1488 = vmatpush.bf16.msra.mxu0 %v908
        %1489 = vmatpush.bf16.msra.mxu0 %v904
        %1490 = vmatpush.bf16.msra.mxu0 %v900
        %1491 = vmatpush.bf16.msra.mxu0 %v896
        %1492 = vmatmul.bf16.gmra.mxu0 %v1457
        %v1493 = vpop.f32.mrf.mxu0
        %v1494 = vadd.f32 0.0, %v1493
        %v1495 = vpop.f32.mrf.mxu0
        %1496 = vdwg.mxu0
        %1497 = vmatpush.bf16.msra.mxu0 %v925
        %1498 = vmatpush.bf16.msra.mxu0 %v921
        %1499 = vmatpush.bf16.msra.mxu0 %v917
        %1500 = vmatpush.bf16.msra.mxu0 %v913
        %1501 = vmatpush.bf16.msra.mxu0 %v909
        %1502 = vmatpush.bf16.msra.mxu0 %v905
        %1503 = vmatpush.bf16.msra.mxu0 %v901
        %1504 = vmatpush.bf16.msra.mxu0 %v897
        %1505 = vmatmul.bf16.gmra.mxu0 %v1457
        %v1506 = vpop.f32.mrf.mxu0
        %v1507 = vadd.f32 0.0, %v1506
        %v1508 = vpop.f32.mrf.mxu0
        %1509 = vdwg.mxu0
        %v1510 = vadd.f32 %v1453, %v1468
        %v1511 = vadd.f32 %v1454, %v1481
        %v1512 = vadd.f32 %v1455, %v1494
        %v1513 = vadd.f32 %v1456, %v1507
        %v1514 = vsub.f32 0.0, %v1510
        %v1515 = vmul.f32 %v1514, 1.442695
        %v1516 = vpow.pop %v1515
        %v1517 = vadd.f32 %v1516, 1.0
        %v1518 = vrcp.pop %v1517
        %v1519 = vmul.f32 %v1517, %v1518
        %v1520 = vsub.f32 1.0, %v1519
        %v1521 = vmul.f32 %v1518, %v1520
        %v1522 = vadd.f32 %v1518, %v1521
        %vm1523 = vweird.f32 %v1517
        %vm1524 = vweird.f32 %v1518
        %vm1525 = vmor %vm1523, %vm1524
        %v1526 = vsel %vm1525, %v1518, %v1522
        %v1527 = vand.u32 2147483647, %v1517
        %vm1528 = vcmp.eq.f32.partialorder %v1527, 8.507059e+37
        %v1529 = vand.u32 %v1517, 2147483648
        %v1530 = vor.u32 1.1754944e-38, %v1529
        %v1531 = vsel %vm1528, %v1530, %v1526
        %v1532 = vmul.f32 1.0, %v1531
        %v1533 = vsub.f32 0.0, %v1511
        %v1534 = vmul.f32 %v1533, 1.442695
        %v1535 = vpow.pop %v1534
        %v1536 = vadd.f32 %v1535, 1.0
        %v1537 = vrcp.pop %v1536
        %v1538 = vmul.f32 %v1536, %v1537
        %v1539 = vsub.f32 1.0, %v1538
        %v1540 = vmul.f32 %v1537, %v1539
        %v1541 = vadd.f32 %v1537, %v1540
        %vm1542 = vweird.f32 %v1536
        %vm1543 = vweird.f32 %v1537
        %vm1544 = vmor %vm1542, %vm1543
        %v1545 = vsel %vm1544, %v1537, %v1541
        %v1546 = vand.u32 2147483647, %v1536
        %vm1547 = vcmp.eq.f32.partialorder %v1546, 8.507059e+37
        %v1548 = vand.u32 %v1536, 2147483648
        %v1549 = vor.u32 1.1754944e-38, %v1548
        %v1550 = vsel %vm1547, %v1549, %v1545
        %v1551 = vmul.f32 1.0, %v1550
        %v1552 = vtanh.pop %v1512
        %v1553 = vsub.f32 0.0, %v1513
        %v1554 = vmul.f32 %v1553, 1.442695
        %v1555 = vpow.pop %v1554
        %v1556 = vadd.f32 %v1555, 1.0
        %v1557 = vrcp.pop %v1556
        %v1558 = vmul.f32 %v1556, %v1557
        %v1559 = vsub.f32 1.0, %v1558
        %v1560 = vmul.f32 %v1557, %v1559
        %v1561 = vadd.f32 %v1557, %v1560
        %vm1562 = vweird.f32 %v1556
        %vm1563 = vweird.f32 %v1557
        %vm1564 = vmor %vm1562, %vm1563
        %v1565 = vsel %vm1564, %v1557, %v1561
        %v1566 = vand.u32 2147483647, %v1556
        %vm1567 = vcmp.eq.f32.partialorder %v1566, 8.507059e+37
        %v1568 = vand.u32 %v1556, 2147483648
        %v1569 = vor.u32 1.1754944e-38, %v1568
        %v1570 = vsel %vm1567, %v1569, %v1565
        %v1571 = vmul.f32 1.0, %v1570
        %v1572 = vmul.f32 %v1551, %v1449
        %v1573 = vmul.f32 %v1532, %v1552
        %v1574 = vadd.f32 %v1572, %v1573
        %v1575 = vtanh.pop %v1574
        %v1576 = vmul.f32 %v1571, %v1575
        %s1577 = scalar_lea.vmem [#allocation2], 160
        %v1578 = vld [vmem:[%s1577] sm:$0xff]
        %v1579 = vld [vmem:[%s1577 + $0x8] sm:$0xff]
        %v1580 = vld [vmem:[%s1577 + $0x10] sm:$0xff]
        %v1581 = vld [vmem:[%s1577 + $0x18] sm:$0xff]
        %v1582 = vpack.c.bf16 %v1576, %v1576
        %1583 = vmatpush.bf16.msra.mxu0 %v922
        %1584 = vmatpush.bf16.msra.mxu0 %v918
        %1585 = vmatpush.bf16.msra.mxu0 %v914
        %1586 = vmatpush.bf16.msra.mxu0 %v910
        %1587 = vmatpush.bf16.msra.mxu0 %v906
        %1588 = vmatpush.bf16.msra.mxu0 %v902
        %1589 = vmatpush.bf16.msra.mxu0 %v898
        %1590 = vmatpush.bf16.msra.mxu0 %v894
        %1591 = vmatmul.bf16.gmra.mxu0 %v1582
        %v1592 = vpop.f32.mrf.mxu0
        %v1593 = vadd.f32 0.0, %v1592
        %v1594 = vpop.f32.mrf.mxu0
        %1595 = vdwg.mxu0
        %1596 = vmatpush.bf16.msra.mxu0 %v923
        %1597 = vmatpush.bf16.msra.mxu0 %v919
        %1598 = vmatpush.bf16.msra.mxu0 %v915
        %1599 = vmatpush.bf16.msra.mxu0 %v911
        %1600 = vmatpush.bf16.msra.mxu0 %v907
        %1601 = vmatpush.bf16.msra.mxu0 %v903
        %1602 = vmatpush.bf16.msra.mxu0 %v899
        %1603 = vmatpush.bf16.msra.mxu0 %v895
        %1604 = vmatmul.bf16.gmra.mxu0 %v1582
        %v1605 = vpop.f32.mrf.mxu0
        %v1606 = vadd.f32 0.0, %v1605
        %v1607 = vpop.f32.mrf.mxu0
        %1608 = vdwg.mxu0
        %1609 = vmatpush.bf16.msra.mxu0 %v924
        %1610 = vmatpush.bf16.msra.mxu0 %v920
        %1611 = vmatpush.bf16.msra.mxu0 %v916
        %1612 = vmatpush.bf16.msra.mxu0 %v912
        %1613 = vmatpush.bf16.msra.mxu0 %v908
        %1614 = vmatpush.bf16.msra.mxu0 %v904
        %1615 = vmatpush.bf16.msra.mxu0 %v900
        %1616 = vmatpush.bf16.msra.mxu0 %v896
        %1617 = vmatmul.bf16.gmra.mxu0 %v1582
        %v1618 = vpop.f32.mrf.mxu0
        %v1619 = vadd.f32 0.0, %v1618
        %v1620 = vpop.f32.mrf.mxu0
        %1621 = vdwg.mxu0
        %1622 = vmatpush.bf16.msra.mxu0 %v925
        %1623 = vmatpush.bf16.msra.mxu0 %v921
        %1624 = vmatpush.bf16.msra.mxu0 %v917
        %1625 = vmatpush.bf16.msra.mxu0 %v913
        %1626 = vmatpush.bf16.msra.mxu0 %v909
        %1627 = vmatpush.bf16.msra.mxu0 %v905
        %1628 = vmatpush.bf16.msra.mxu0 %v901
        %1629 = vmatpush.bf16.msra.mxu0 %v897
        %1630 = vmatmul.bf16.gmra.mxu0 %v1582
        %v1631 = vpop.f32.mrf.mxu0
        %v1632 = vadd.f32 0.0, %v1631
        %v1633 = vpop.f32.mrf.mxu0
        %1634 = vdwg.mxu0
        %v1635 = vadd.f32 %v1578, %v1593
        %v1636 = vadd.f32 %v1579, %v1606
        %v1637 = vadd.f32 %v1580, %v1619
        %v1638 = vadd.f32 %v1581, %v1632
        %v1639 = vsub.f32 0.0, %v1635
        %v1640 = vmul.f32 %v1639, 1.442695
        %v1641 = vpow.pop %v1640
        %v1642 = vadd.f32 %v1641, 1.0
        %v1643 = vrcp.pop %v1642
        %v1644 = vmul.f32 %v1642, %v1643
        %v1645 = vsub.f32 1.0, %v1644
        %v1646 = vmul.f32 %v1643, %v1645
        %v1647 = vadd.f32 %v1643, %v1646
        %vm1648 = vweird.f32 %v1642
        %vm1649 = vweird.f32 %v1643
        %vm1650 = vmor %vm1648, %vm1649
        %v1651 = vsel %vm1650, %v1643, %v1647
        %v1652 = vand.u32 2147483647, %v1642
        %vm1653 = vcmp.eq.f32.partialorder %v1652, 8.507059e+37
        %v1654 = vand.u32 %v1642, 2147483648
        %v1655 = vor.u32 1.1754944e-38, %v1654
        %v1656 = vsel %vm1653, %v1655, %v1651
        %v1657 = vmul.f32 1.0, %v1656
        %v1658 = vsub.f32 0.0, %v1636
        %v1659 = vmul.f32 %v1658, 1.442695
        %v1660 = vpow.pop %v1659
        %v1661 = vadd.f32 %v1660, 1.0
        %v1662 = vrcp.pop %v1661
        %v1663 = vmul.f32 %v1661, %v1662
        %v1664 = vsub.f32 1.0, %v1663
        %v1665 = vmul.f32 %v1662, %v1664
        %v1666 = vadd.f32 %v1662, %v1665
        %vm1667 = vweird.f32 %v1661
        %vm1668 = vweird.f32 %v1662
        %vm1669 = vmor %vm1667, %vm1668
        %v1670 = vsel %vm1669, %v1662, %v1666
        %v1671 = vand.u32 2147483647, %v1661
        %vm1672 = vcmp.eq.f32.partialorder %v1671, 8.507059e+37
        %v1673 = vand.u32 %v1661, 2147483648
        %v1674 = vor.u32 1.1754944e-38, %v1673
        %v1675 = vsel %vm1672, %v1674, %v1670
        %v1676 = vmul.f32 1.0, %v1675
        %v1677 = vtanh.pop %v1637
        %v1678 = vsub.f32 0.0, %v1638
        %v1679 = vmul.f32 %v1678, 1.442695
        %v1680 = vpow.pop %v1679
        %v1681 = vadd.f32 %v1680, 1.0
        %v1682 = vrcp.pop %v1681
        %v1683 = vmul.f32 %v1681, %v1682
        %v1684 = vsub.f32 1.0, %v1683
        %v1685 = vmul.f32 %v1682, %v1684
        %v1686 = vadd.f32 %v1682, %v1685
        %vm1687 = vweird.f32 %v1681
        %vm1688 = vweird.f32 %v1682
        %vm1689 = vmor %vm1687, %vm1688
        %v1690 = vsel %vm1689, %v1682, %v1686
        %v1691 = vand.u32 2147483647, %v1681
        %vm1692 = vcmp.eq.f32.partialorder %v1691, 8.507059e+37
        %v1693 = vand.u32 %v1681, 2147483648
        %v1694 = vor.u32 1.1754944e-38, %v1693
        %v1695 = vsel %vm1692, %v1694, %v1690
        %v1696 = vmul.f32 1.0, %v1695
        %v1697 = vmul.f32 %v1676, %v1574
        %v1698 = vmul.f32 %v1657, %v1677
        %v1699 = vadd.f32 %v1697, %v1698
        %v1700 = vtanh.pop %v1699
        %v1701 = vmul.f32 %v1696, %v1700
        %s1702 = scalar_lea.vmem [#allocation2], 192
        %v1703 = vld [vmem:[%s1702] sm:$0xff]
        %v1704 = vld [vmem:[%s1702 + $0x8] sm:$0xff]
        %v1705 = vld [vmem:[%s1702 + $0x10] sm:$0xff]
        %v1706 = vld [vmem:[%s1702 + $0x18] sm:$0xff]
        %v1707 = vpack.c.bf16 %v1701, %v1701
        %1708 = vmatpush.bf16.msra.mxu0 %v922
        %1709 = vmatpush.bf16.msra.mxu0 %v918
        %1710 = vmatpush.bf16.msra.mxu0 %v914
        %1711 = vmatpush.bf16.msra.mxu0 %v910
        %1712 = vmatpush.bf16.msra.mxu0 %v906
        %1713 = vmatpush.bf16.msra.mxu0 %v902
        %1714 = vmatpush.bf16.msra.mxu0 %v898
        %1715 = vmatpush.bf16.msra.mxu0 %v894
        %1716 = vmatmul.bf16.gmra.mxu0 %v1707
        %v1717 = vpop.f32.mrf.mxu0
        %v1718 = vadd.f32 0.0, %v1717
        %v1719 = vpop.f32.mrf.mxu0
        %1720 = vdwg.mxu0
        %1721 = vmatpush.bf16.msra.mxu0 %v923
        %1722 = vmatpush.bf16.msra.mxu0 %v919
        %1723 = vmatpush.bf16.msra.mxu0 %v915
        %1724 = vmatpush.bf16.msra.mxu0 %v911
        %1725 = vmatpush.bf16.msra.mxu0 %v907
        %1726 = vmatpush.bf16.msra.mxu0 %v903
        %1727 = vmatpush.bf16.msra.mxu0 %v899
        %1728 = vmatpush.bf16.msra.mxu0 %v895
        %1729 = vmatmul.bf16.gmra.mxu0 %v1707
        %v1730 = vpop.f32.mrf.mxu0
        %v1731 = vadd.f32 0.0, %v1730
        %v1732 = vpop.f32.mrf.mxu0
        %1733 = vdwg.mxu0
        %1734 = vmatpush.bf16.msra.mxu0 %v924
        %1735 = vmatpush.bf16.msra.mxu0 %v920
        %1736 = vmatpush.bf16.msra.mxu0 %v916
        %1737 = vmatpush.bf16.msra.mxu0 %v912
        %1738 = vmatpush.bf16.msra.mxu0 %v908
        %1739 = vmatpush.bf16.msra.mxu0 %v904
        %1740 = vmatpush.bf16.msra.mxu0 %v900
        %1741 = vmatpush.bf16.msra.mxu0 %v896
        %1742 = vmatmul.bf16.gmra.mxu0 %v1707
        %v1743 = vpop.f32.mrf.mxu0
        %v1744 = vadd.f32 0.0, %v1743
        %v1745 = vpop.f32.mrf.mxu0
        %1746 = vdwg.mxu0
        %1747 = vmatpush.bf16.msra.mxu0 %v925
        %1748 = vmatpush.bf16.msra.mxu0 %v921
        %1749 = vmatpush.bf16.msra.mxu0 %v917
        %1750 = vmatpush.bf16.msra.mxu0 %v913
        %1751 = vmatpush.bf16.msra.mxu0 %v909
        %1752 = vmatpush.bf16.msra.mxu0 %v905
        %1753 = vmatpush.bf16.msra.mxu0 %v901
        %1754 = vmatpush.bf16.msra.mxu0 %v897
        %1755 = vmatmul.bf16.gmra.mxu0 %v1707
        %v1756 = vpop.f32.mrf.mxu0
        %v1757 = vadd.f32 0.0, %v1756
        %v1758 = vpop.f32.mrf.mxu0
        %1759 = vdwg.mxu0
        %v1760 = vadd.f32 %v1703, %v1718
        %v1761 = vadd.f32 %v1704, %v1731
        %v1762 = vadd.f32 %v1705, %v1744
        %v1763 = vadd.f32 %v1706, %v1757
        %v1764 = vsub.f32 0.0, %v1760
        %v1765 = vmul.f32 %v1764, 1.442695
        %v1766 = vpow.pop %v1765
        %v1767 = vadd.f32 %v1766, 1.0
        %v1768 = vrcp.pop %v1767
        %v1769 = vmul.f32 %v1767, %v1768
        %v1770 = vsub.f32 1.0, %v1769
        %v1771 = vmul.f32 %v1768, %v1770
        %v1772 = vadd.f32 %v1768, %v1771
        %vm1773 = vweird.f32 %v1767
        %vm1774 = vweird.f32 %v1768
        %vm1775 = vmor %vm1773, %vm1774
        %v1776 = vsel %vm1775, %v1768, %v1772
        %v1777 = vand.u32 2147483647, %v1767
        %vm1778 = vcmp.eq.f32.partialorder %v1777, 8.507059e+37
        %v1779 = vand.u32 %v1767, 2147483648
        %v1780 = vor.u32 1.1754944e-38, %v1779
        %v1781 = vsel %vm1778, %v1780, %v1776
        %v1782 = vmul.f32 1.0, %v1781
        %v1783 = vsub.f32 0.0, %v1761
        %v1784 = vmul.f32 %v1783, 1.442695
        %v1785 = vpow.pop %v1784
        %v1786 = vadd.f32 %v1785, 1.0
        %v1787 = vrcp.pop %v1786
        %v1788 = vmul.f32 %v1786, %v1787
        %v1789 = vsub.f32 1.0, %v1788
        %v1790 = vmul.f32 %v1787, %v1789
        %v1791 = vadd.f32 %v1787, %v1790
        %vm1792 = vweird.f32 %v1786
        %vm1793 = vweird.f32 %v1787
        %vm1794 = vmor %vm1792, %vm1793
        %v1795 = vsel %vm1794, %v1787, %v1791
        %v1796 = vand.u32 2147483647, %v1786
        %vm1797 = vcmp.eq.f32.partialorder %v1796, 8.507059e+37
        %v1798 = vand.u32 %v1786, 2147483648
        %v1799 = vor.u32 1.1754944e-38, %v1798
        %v1800 = vsel %vm1797, %v1799, %v1795
        %v1801 = vmul.f32 1.0, %v1800
        %v1802 = vtanh.pop %v1762
        %v1803 = vsub.f32 0.0, %v1763
        %v1804 = vmul.f32 %v1803, 1.442695
        %v1805 = vpow.pop %v1804
        %v1806 = vadd.f32 %v1805, 1.0
        %v1807 = vrcp.pop %v1806
        %v1808 = vmul.f32 %v1806, %v1807
        %v1809 = vsub.f32 1.0, %v1808
        %v1810 = vmul.f32 %v1807, %v1809
        %v1811 = vadd.f32 %v1807, %v1810
        %vm1812 = vweird.f32 %v1806
        %vm1813 = vweird.f32 %v1807
        %vm1814 = vmor %vm1812, %vm1813
        %v1815 = vsel %vm1814, %v1807, %v1811
        %v1816 = vand.u32 2147483647, %v1806
        %vm1817 = vcmp.eq.f32.partialorder %v1816, 8.507059e+37
        %v1818 = vand.u32 %v1806, 2147483648
        %v1819 = vor.u32 1.1754944e-38, %v1818
        %v1820 = vsel %vm1817, %v1819, %v1815
        %v1821 = vmul.f32 1.0, %v1820
        %v1822 = vmul.f32 %v1801, %v1699
        %v1823 = vmul.f32 %v1782, %v1802
        %v1824 = vadd.f32 %v1822, %v1823
        %v1825 = vtanh.pop %v1824
        %v1826 = vmul.f32 %v1821, %v1825
        %s1827 = scalar_lea.vmem [#allocation2], 224
        %v1828 = vld [vmem:[%s1827] sm:$0xff]
        %v1829 = vld [vmem:[%s1827 + $0x8] sm:$0xff]
        %v1830 = vld [vmem:[%s1827 + $0x10] sm:$0xff]
        %v1831 = vld [vmem:[%s1827 + $0x18] sm:$0xff]
        %v1832 = vpack.c.bf16 %v1826, %v1826
        %1833 = vmatpush.bf16.msra.mxu0 %v922
        %1834 = vmatpush.bf16.msra.mxu0 %v918
        %1835 = vmatpush.bf16.msra.mxu0 %v914
        %1836 = vmatpush.bf16.msra.mxu0 %v910
        %1837 = vmatpush.bf16.msra.mxu0 %v906
        %1838 = vmatpush.bf16.msra.mxu0 %v902
        %1839 = vmatpush.bf16.msra.mxu0 %v898
        %1840 = vmatpush.bf16.msra.mxu0 %v894
        %1841 = vmatmul.bf16.gmra.mxu0 %v1832
        %v1842 = vpop.f32.mrf.mxu0
        %v1843 = vadd.f32 0.0, %v1842
        %v1844 = vpop.f32.mrf.mxu0
        %1845 = vdwg.mxu0
        %1846 = vmatpush.bf16.msra.mxu0 %v923
        %1847 = vmatpush.bf16.msra.mxu0 %v919
        %1848 = vmatpush.bf16.msra.mxu0 %v915
        %1849 = vmatpush.bf16.msra.mxu0 %v911
        %1850 = vmatpush.bf16.msra.mxu0 %v907
        %1851 = vmatpush.bf16.msra.mxu0 %v903
        %1852 = vmatpush.bf16.msra.mxu0 %v899
        %1853 = vmatpush.bf16.msra.mxu0 %v895
        %1854 = vmatmul.bf16.gmra.mxu0 %v1832
        %v1855 = vpop.f32.mrf.mxu0
        %v1856 = vadd.f32 0.0, %v1855
        %v1857 = vpop.f32.mrf.mxu0
        %1858 = vdwg.mxu0
        %1859 = vmatpush.bf16.msra.mxu0 %v924
        %1860 = vmatpush.bf16.msra.mxu0 %v920
        %1861 = vmatpush.bf16.msra.mxu0 %v916
        %1862 = vmatpush.bf16.msra.mxu0 %v912
        %1863 = vmatpush.bf16.msra.mxu0 %v908
        %1864 = vmatpush.bf16.msra.mxu0 %v904
        %1865 = vmatpush.bf16.msra.mxu0 %v900
        %1866 = vmatpush.bf16.msra.mxu0 %v896
        %1867 = vmatmul.bf16.gmra.mxu0 %v1832
        %v1868 = vpop.f32.mrf.mxu0
        %v1869 = vadd.f32 0.0, %v1868
        %v1870 = vpop.f32.mrf.mxu0
        %1871 = vdwg.mxu0
        %1872 = vmatpush.bf16.msra.mxu0 %v925
        %1873 = vmatpush.bf16.msra.mxu0 %v921
        %1874 = vmatpush.bf16.msra.mxu0 %v917
        %1875 = vmatpush.bf16.msra.mxu0 %v913
        %1876 = vmatpush.bf16.msra.mxu0 %v909
        %1877 = vmatpush.bf16.msra.mxu0 %v905
        %1878 = vmatpush.bf16.msra.mxu0 %v901
        %1879 = vmatpush.bf16.msra.mxu0 %v897
        %1880 = vmatmul.bf16.gmra.mxu0 %v1832
        %v1881 = vpop.f32.mrf.mxu0
        %v1882 = vadd.f32 0.0, %v1881
        %v1883 = vpop.f32.mrf.mxu0
        %1884 = vdwg.mxu0
        %v1885 = vadd.f32 %v1828, %v1843
        %v1886 = vadd.f32 %v1829, %v1856
        %v1887 = vadd.f32 %v1830, %v1869
        %v1888 = vadd.f32 %v1831, %v1882
        %v1889 = vsub.f32 0.0, %v1885
        %v1890 = vmul.f32 %v1889, 1.442695
        %v1891 = vpow.pop %v1890
        %v1892 = vadd.f32 %v1891, 1.0
        %v1893 = vrcp.pop %v1892
        %v1894 = vmul.f32 %v1892, %v1893
        %v1895 = vsub.f32 1.0, %v1894
        %v1896 = vmul.f32 %v1893, %v1895
        %v1897 = vadd.f32 %v1893, %v1896
        %vm1898 = vweird.f32 %v1892
        %vm1899 = vweird.f32 %v1893
        %vm1900 = vmor %vm1898, %vm1899
        %v1901 = vsel %vm1900, %v1893, %v1897
        %v1902 = vand.u32 2147483647, %v1892
        %vm1903 = vcmp.eq.f32.partialorder %v1902, 8.507059e+37
        %v1904 = vand.u32 %v1892, 2147483648
        %v1905 = vor.u32 1.1754944e-38, %v1904
        %v1906 = vsel %vm1903, %v1905, %v1901
        %v1907 = vmul.f32 1.0, %v1906
        %v1908 = vsub.f32 0.0, %v1886
        %v1909 = vmul.f32 %v1908, 1.442695
        %v1910 = vpow.pop %v1909
        %v1911 = vadd.f32 %v1910, 1.0
        %v1912 = vrcp.pop %v1911
        %v1913 = vmul.f32 %v1911, %v1912
        %v1914 = vsub.f32 1.0, %v1913
        %v1915 = vmul.f32 %v1912, %v1914
        %v1916 = vadd.f32 %v1912, %v1915
        %vm1917 = vweird.f32 %v1911
        %vm1918 = vweird.f32 %v1912
        %vm1919 = vmor %vm1917, %vm1918
        %v1920 = vsel %vm1919, %v1912, %v1916
        %v1921 = vand.u32 2147483647, %v1911
        %vm1922 = vcmp.eq.f32.partialorder %v1921, 8.507059e+37
        %v1923 = vand.u32 %v1911, 2147483648
        %v1924 = vor.u32 1.1754944e-38, %v1923
        %v1925 = vsel %vm1922, %v1924, %v1920
        %v1926 = vmul.f32 1.0, %v1925
        %v1927 = vtanh.pop %v1887
        %v1928 = vsub.f32 0.0, %v1888
        %v1929 = vmul.f32 %v1928, 1.442695
        %v1930 = vpow.pop %v1929
        %v1931 = vadd.f32 %v1930, 1.0
        %v1932 = vrcp.pop %v1931
        %v1933 = vmul.f32 %v1931, %v1932
        %v1934 = vsub.f32 1.0, %v1933
        %v1935 = vmul.f32 %v1932, %v1934
        %v1936 = vadd.f32 %v1932, %v1935
        %vm1937 = vweird.f32 %v1931
        %vm1938 = vweird.f32 %v1932
        %vm1939 = vmor %vm1937, %vm1938
        %v1940 = vsel %vm1939, %v1932, %v1936
        %v1941 = vand.u32 2147483647, %v1931
        %vm1942 = vcmp.eq.f32.partialorder %v1941, 8.507059e+37
        %v1943 = vand.u32 %v1931, 2147483648
        %v1944 = vor.u32 1.1754944e-38, %v1943
        %v1945 = vsel %vm1942, %v1944, %v1940
        %v1946 = vmul.f32 1.0, %v1945
        %v1947 = vmul.f32 %v1926, %v1824
        %v1948 = vmul.f32 %v1907, %v1927
        %v1949 = vadd.f32 %v1947, %v1948
        %v1950 = vtanh.pop %v1949
        %v1951 = vmul.f32 %v1946, %v1950
        %v1952 = vpack.c.bf16 %v1951, %v1951
        %v1953 = vld [vmem:[%s4] sm:$0xf]
        %v1954 = vld [vmem:[%s4 + $0x4] sm:$0xf]
        %v1955 = vld [vmem:[%s4 + $0x8] sm:$0xf]
        %v1956 = vld [vmem:[%s4 + $0xc] sm:$0xf]
        %v1957 = vld [vmem:[%s4 + $0x10] sm:$0xf]
        %v1958 = vld [vmem:[%s4 + $0x14] sm:$0xf]
        %v1959 = vld [vmem:[%s4 + $0x18] sm:$0xf]
        %v1960 = vld [vmem:[%s4 + $0x1c] sm:$0xf]
        %v1961 = vld [vmem:[%s4 + $0x20] sm:$0xf]
        %v1962 = vld [vmem:[%s4 + $0x24] sm:$0xf]
        %v1963 = vld [vmem:[%s4 + $0x28] sm:$0xf]
        %v1964 = vld [vmem:[%s4 + $0x2c] sm:$0xf]
        %v1965 = vld [vmem:[%s4 + $0x30] sm:$0xf]
        %v1966 = vld [vmem:[%s4 + $0x34] sm:$0xf]
        %v1967 = vld [vmem:[%s4 + $0x38] sm:$0xf]
        %v1968 = vld [vmem:[%s4 + $0x3c] sm:$0xf]
        %v1969 = vperm.slane %v336, 0
        %v1986 = vunpack.c.l.b16 %v1953
        %v1987 = vunpack.c.l.b16 %v1954
        %v1988 = vunpack.c.l.b16 %v1955
        %v1989 = vunpack.c.l.b16 %v1956
        %v1990 = vunpack.c.l.b16 %v1957
        %v1991 = vunpack.c.l.b16 %v1958
        %v1992 = vunpack.c.l.b16 %v1959
        %v1993 = vunpack.c.l.b16 %v1960
        %v1994 = vunpack.c.l.b16 %v1961
        %v1995 = vunpack.c.l.b16 %v1962
        %v1996 = vunpack.c.l.b16 %v1963
        %v1997 = vunpack.c.l.b16 %v1964
        %v1998 = vunpack.c.l.b16 %v1965
        %v1999 = vunpack.c.l.b16 %v1966
        %v2000 = vunpack.c.l.b16 %v1967
        %v2001 = vunpack.c.l.b16 %v1968
        %v2002 = vpack.c.b16 %v1987, %v1986
        %v2003 = vpack.c.b16 %v1989, %v1988
        %v2004 = vpack.c.b16 %v1991, %v1990
        %v2005 = vpack.c.b16 %v1993, %v1992
        %v2006 = vpack.c.b16 %v1995, %v1994
        %v2007 = vpack.c.b16 %v1997, %v1996
        %v2008 = vpack.c.b16 %v1999, %v1998
        %v2009 = vpack.c.b16 %v2001, %v2000
        %2018 = vmatpush.bf16.msra.mxu0 %v2009
        %2019 = vmatpush.bf16.msra.mxu0 %v2008
        %2020 = vmatpush.bf16.msra.mxu0 %v2007
        %2021 = vmatpush.bf16.msra.mxu0 %v2006
        %2022 = vmatpush.bf16.msra.mxu0 %v2005
        %2023 = vmatpush.bf16.msra.mxu0 %v2004
        %2024 = vmatpush.bf16.msra.mxu0 %v2003
        %2025 = vmatpush.bf16.msra.mxu0 %v2002
        %2026 = vmatmul.bf16.gmra.mxu0 %v1952
        %v2027 = vpop.f32.mrf.mxu0
        %v2028 = vadd.f32 %v1969, %v2027
        %v2029 = vpop.f32.mrf.mxu0
        %2030 = vdwg.mxu0
        %v2031 = vmax.f32 %v2028, 0.0
        %v2032 = vpack.c.bf16 %v2031, %v2031
        %v2033 = vld [vmem:[%s5] sm:$0xf]
        %v2034 = vld [vmem:[%s5 + $0x4] sm:$0xf]
        %v2035 = vld [vmem:[%s5 + $0x8] sm:$0xf]
        %v2036 = vld [vmem:[%s5 + $0xc] sm:$0xf]
        %v2037 = vld [vmem:[%s5 + $0x10] sm:$0xf]
        %v2038 = vld [vmem:[%s5 + $0x14] sm:$0xf]
        %v2039 = vld [vmem:[%s5 + $0x18] sm:$0xf]
        %v2040 = vld [vmem:[%s5 + $0x1c] sm:$0xf]
        %v2041 = vperm.slane %v337, 0
        %v2050 = vunpack.c.l.b16 %v2033
        %v2051 = vunpack.c.l.b16 %v2034
        %v2052 = vunpack.c.l.b16 %v2035
        %v2053 = vunpack.c.l.b16 %v2036
        %v2054 = vunpack.c.l.b16 %v2037
        %v2055 = vunpack.c.l.b16 %v2038
        %v2056 = vunpack.c.l.b16 %v2039
        %v2057 = vunpack.c.l.b16 %v2040
        %v2058 = vpack.c.b16 %v2051, %v2050
        %v2059 = vpack.c.b16 %v2053, %v2052
        %v2060 = vpack.c.b16 %v2055, %v2054
        %v2061 = vpack.c.b16 %v2057, %v2056
        %vm2066 = vcmask 523264
        %v2068 = vsel %vm2066, %v2032, 0
        %2070 = vmatpush.bf16.msra.mxu0 0
        %2071 = vmatpush.bf16.msra.mxu0 0
        %2072 = vmatpush.bf16.msra.mxu0 0
        %2073 = vmatpush.bf16.msra.mxu0 0
        %2074 = vmatpush.bf16.msra.mxu0 %v2061
        %2075 = vmatpush.bf16.msra.mxu0 %v2060
        %2076 = vmatpush.bf16.msra.mxu0 %v2059
        %2077 = vmatpush.bf16.msra.mxu0 %v2058
        %2078 = vmatmul.bf16.gmra.mxu0 %v2068
        %v2079 = vpop.f32.mrf.mxu0
        %v2080 = vadd.f32 %v2041, %v2079
        %v2081 = vpop.f32.mrf.mxu0
        %2082 = vdwg.mxu0
        %v2083 = vmax.f32 %v2080, -20.0
        %v2084 = vmin.f32 %v2083, 2.0
        %v2085 = vmul.f32 %v2084, 1.442695
        %v2086 = vpow.pop %v2085
        %v2087 = vld [vmem:[%s331] sm:$0xff]
        %2089 = vrot.lane.b32.xlu0 %v2087, 12
        %v2090 = vpop.permute.xlu0 %2089
        %v2092 = vmul.f32 %v2086, %v2090
        %2094 = vrot.lane.b32.xlu0 %v2092, 116
        %v2095 = vpop.permute.xlu0 %2094
        %v2097 = vadd.f32 %v2080, %v2095
        %2099 = vrot.lane.b32.xlu0 %v2080, 12
        %v2100 = vpop.permute.xlu0 %2099
        %2103 = vrot.lane.b32.xlu0 %v2086, 12
        %v2104 = vpop.permute.xlu0 %2103
        %vm2106 = vcmask 97280
        %v2107 = vsel %vm2106, %v2097, %v2100
        %vm2108 = vcmask 195584
        %v2109 = vsel %vm2108, %v2107, %v2104
        %vm2110 = vcmask 293888
        %2111 = vst.msk [vmem:[%s327] sm:$0xff] %vm2110, %v2109
        %s2112 = sand.u32 %s190, 1
        %s2113 = scalar_lea.sflag [#allocation5], %s2112
        %s2114 = sand.u32 %s190, 1
        %s2115 = smul.addr %s2114, 8
        %s2116 = scalar_lea.vmem [#allocation8], %s2115
        // Predicated region
        $region57: #{tpu_custom_call.1} parent=47 // pred_check
          %p2117 = pneg %p200
        $region58: #{tpu_custom_call.1} parent=47 // pred_check_branch
          %2119 = sbr.rel (%p2117) target = $region60
        $region59: #{tpu_custom_call.1} parent=47 // pred_region
          %2121 = vsyncadd %s2113, 0
          %s2122 = smul.addr %s25, 8
          %s2123 = scalar_lea.hbm %s7, %s2122
          %s2125 = sshll.u32 %s2116, 4
          %s2126 = int_to_ptr.vmem [resolvable:$true] %s2125
          %s2127 = sshll.u32 %s2123, 4
          %s2128 = int_to_ptr.hbm [resolvable:$true] %s2127
          %2130 = dma.vmem_to_hbm [thread:$0]  %s2126, 128, %s2128, %s2113
        $region60: #{tpu_custom_call.1} parent=47 // pred_fallthru
          _
      $region48: #{tpu_custom_call.1} parent=5 // pred_fallthru
        _
      %p2131 = scmp.le.s32.totalorder 2, %s20
      // Predicated region
      $region61: #{tpu_custom_call.1} parent=5 // pred_check
        %p2132 = pneg %p2131
      $region62: #{tpu_custom_call.1} parent=5 // pred_check_branch
        %2134 = sbr.rel (%p2132) target = $region64
      $region63: #{tpu_custom_call.1} parent=5 // pred_region
        %s2135 = ssub.s32 %s20, 2
        // Predicated region
        $region65: #{tpu_custom_call.1} parent=63 // pred_check
          %p2136 = pneg %p206
        $region66: #{tpu_custom_call.1} parent=63 // pred_check_branch
          %2138 = sbr.rel (%p2136) target = $region68
        $region67: #{tpu_custom_call.1} parent=63 // pred_region
          %s2139 = sand.u32 %s191, 1
          %s2140 = scalar_lea.sflag [#allocation5], %s2139
          %s2141 = sand.u32 %s191, 1
          %s2142 = smul.addr %s2141, 8
          %s2143 = scalar_lea.vmem [#allocation8], %s2142
          %2145 = dma.done %s2140, 128
        $region68: #{tpu_custom_call.1} parent=63 // pred_fallthru
          _
      $region64: #{tpu_custom_call.1} parent=5 // pred_fallthru
        _
    $region6: #{tpu_custom_call.1} parent=1 // loop_footer
      %s24 = sadd.s32 1, %s20
    $region7: #{tpu_custom_call.1} parent=1 // loop_footer_branch
      %19 = sbr.rel target = $region3
    $region8: #{tpu_custom_call.1} parent=1 // loop_exit
      _
    %2146 = vsyncpa [#allocation4], 1
    %s2147 = scalar_lea.sflag [#allocation4], 1
    %2148 = vsyncpa %s2147, 1
    %2149 = vsyncpa [#allocation7], 1
    %2150 = vsyncpa [#allocation5], 1
    %s2151 = scalar_lea.sflag [#allocation5], 1
    %2152 = vsyncpa %s2151, 1

</llo_original>
